<compile_context>
chip_gen: v7x
topology: tpu7x:2x2x1
jax: 0.10.0
libtpu: 0.0.40
codegen_flags: <defaults>
</compile_context>

<pallas_src>
import functools

import jax
import jax.numpy as jnp
from jax.experimental import pallas as pl
from jax.experimental.pallas import tpu as pltpu


# ----------------------------------------------------------------------------
# Pallas kernel (single invocation, everything resident in VMEM)
# ----------------------------------------------------------------------------
def fused_rnn_kernel(x_ref, *refs, num_layers, hidden_size, seq_len, batch,
                     matmul_dtype):
    """Fused multi-layer LSTM + ReLU + Linear forward.

    Ref layout (after x_ref):
      refs[3l:3l+3] = (wih_l (D_l,4H), whh_l (H,4H), b_l (1,4H))  per layer
      refs[3L]   = fc_w (H, C)
      refs[3L+1] = fc_b (1, C)
      refs[3L+2] = out_ref (B, C)                               [output]
      refs[3L+3] = x_tm_scr (T*B, D0) f32                       [scratch]
      refs[3L+4] = seq_scr  (T*B, H)  f32                       [scratch]

    x_ref: (B, T, D0) batch-first input, exactly as the PyTorch module gets it.
    Time-major 2-D staging lets every per-layer input GEMM be a single big 2-D
    matmul and every timestep's pre-gates be a contiguous row block.
    """
    L, H, T, B = num_layers, hidden_size, seq_len, batch
    layer_refs = [refs[3 * l: 3 * l + 3] for l in range(L)]
    fcw_ref = refs[3 * L]
    fcb_ref = refs[3 * L + 1]
    out_ref = refs[3 * L + 2]
    x_tm_scr = refs[3 * L + 3]
    seq_scr = refs[3 * L + 4]

    # Stage batch-first input -> time-major (T*B, D0) once, inside VMEM.
    for t in range(T):
        x_tm_scr[t * B:(t + 1) * B, :] = x_ref[:, t, :]

    h = None
    for layer in range(L):
        wih_ref, whh_ref, b_ref = layer_refs[layer]
        last = layer == L - 1

        # ---- Hoisted input GEMM: all T timesteps in one MXU matmul --------
        seq_in = x_tm_scr[...] if layer == 0 else seq_scr[...]
        gx = jnp.dot(seq_in.astype(matmul_dtype), wih_ref[...],
                     preferred_element_type=jnp.float32) + b_ref[...]
        # gx: (T*B, 4H); rows [t*B:(t+1)*B] are timestep t's pre-activations.

        whh = whh_ref[...]                        # (H, 4H), resident in VMEM
        h = jnp.zeros((B, H), jnp.float32)
        c = jnp.zeros((B, H), jnp.float32)

        # ---- Serial recurrence: only (B,H)@(H,4H) + VPU/EUP per step ------
        for t in range(T):                        # static unrolled loop
            gates = gx[t * B:(t + 1) * B, :] + jnp.dot(
                h.astype(matmul_dtype), whh,
                preferred_element_type=jnp.float32)        # (B, 4H), f32
            # Whole-width transcendentals (one EUP pass each), then cheap
            # lane slices in PyTorch gate order (i, f, g, o).
            sig = jax.nn.sigmoid(gates)
            tnh = jnp.tanh(gates)
            i_g = sig[:, 0 * H:1 * H]
            f_g = sig[:, 1 * H:2 * H]
            g_g = tnh[:, 2 * H:3 * H]
            o_g = sig[:, 3 * H:4 * H]
            c = f_g * c + i_g * g_g
            h = o_g * jnp.tanh(c)
            if not last:
                # Inter-layer activation stays in VMEM, never touches HBM.
                seq_scr[t * B:(t + 1) * B, :] = h

    # ---- Fused ReLU + final Linear on the last timestep only --------------
    h_relu = jnp.maximum(h, 0.0)
    out_ref[...] = (jnp.dot(h_relu.astype(matmul_dtype), fcw_ref[...],
                            preferred_element_type=jnp.float32)
                    + fcb_ref[...])


# ----------------------------------------------------------------------------
# Wrapper
# ----------------------------------------------------------------------------
def rnn_forward(x, params, *, matmul_dtype=jnp.float32):
    """x: (B, T, input_size) float32, PyTorch batch_first. Returns (B, C)."""
    x = jnp.asarray(x, jnp.float32)
    B, T, D0 = x.shape
    num_layers = len(params["lstm"])
    H = params["lstm"][0][1].shape[1]             # w_hh: (4H, H)
    C = params["fc_w"].shape[0]

    inputs = [x]
    for (w_ih, w_hh, b_ih, b_hh) in params["lstm"]:
        inputs.append(jnp.asarray(w_ih, jnp.float32).T.astype(matmul_dtype))  # (D, 4H)
        inputs.append(jnp.asarray(w_hh, jnp.float32).T.astype(matmul_dtype))  # (H, 4H)
        inputs.append(jnp.asarray(b_ih + b_hh, jnp.float32).reshape(1, 4 * H))
    inputs.append(jnp.asarray(params["fc_w"], jnp.float32).T.astype(matmul_dtype))  # (H, C)
    inputs.append(jnp.asarray(params["fc_b"], jnp.float32).reshape(1, C))

    kernel = functools.partial(
        fused_rnn_kernel, num_layers=num_layers, hidden_size=H,
        seq_len=T, batch=B, matmul_dtype=matmul_dtype)

    return pl.pallas_call(
        kernel,
        out_shape=jax.ShapeDtypeStruct((B, C), jnp.float32),
        scratch_shapes=[
            pltpu.VMEM((T * B, D0), jnp.float32),   # time-major staged input
            pltpu.VMEM((T * B, H), jnp.float32),    # inter-layer hidden sequence
        ],
    )(*inputs)


# ----------------------------------------------------------------------------
# Pure-JAX reference (matches nn.LSTM + relu + fc exactly) for a sanity check
# ----------------------------------------------------------------------------
def rnn_reference(x, params):
    x = jnp.asarray(x, jnp.float32)
    B, T, _ = x.shape
    H = params["lstm"][0][1].shape[1]
    seq = x
    for (w_ih, w_hh, b_ih, b_hh) in params["lstm"]:
        h = jnp.zeros((B, H), jnp.float32)
        c = jnp.zeros((B, H), jnp.float32)
        outs = []
        for t in range(T):
            g = seq[:, t, :] @ w_ih.T + h @ w_hh.T + b_ih + b_hh
            i = jax.nn.sigmoid(g[:, 0 * H:1 * H])
            f = jax.nn.sigmoid(g[:, 1 * H:2 * H])
            gg = jnp.tanh(g[:, 2 * H:3 * H])
            o = jax.nn.sigmoid(g[:, 3 * H:4 * H])
            c = f * c + i * gg
            h = o * jnp.tanh(c)
            outs.append(h)
        seq = jnp.stack(outs, axis=1)
    h_last = jnp.maximum(seq[:, -1, :], 0.0)
    return h_last @ params["fc_w"].T + params["fc_b"]


# ----------------------------------------------------------------------------
# Deterministic parameter init (uniform(-1/sqrt(H), 1/sqrt(H)) like nn.LSTM)
# ----------------------------------------------------------------------------
def init_params(key, input_size, hidden_size, num_layers, num_classes):
    H = hidden_size
    bound = 1.0 / jnp.sqrt(jnp.float32(H))
    params = {"lstm": []}
    for layer in range(num_layers):
        D = input_size if layer == 0 else H
        key, k1, k2, k3, k4 = jax.random.split(key, 5)
        w_ih = jax.random.uniform(k1, (4 * H, D), jnp.float32, -bound, bound)
        w_hh = jax.random.uniform(k2, (4 * H, H), jnp.float32, -bound, bound)
        b_ih = jax.random.uniform(k3, (4 * H,), jnp.float32, -bound, bound)
        b_hh = jax.random.uniform(k4, (4 * H,), jnp.float32, -bound, bound)
        params["lstm"].append((w_ih, w_hh, b_ih, b_hh))
    key, k5, k6 = jax.random.split(key, 3)
    params["fc_w"] = jax.random.uniform(k5, (num_classes, H), jnp.float32,
                                        -bound, bound)
    params["fc_b"] = jax.random.uniform(k6, (num_classes,), jnp.float32,
                                        -bound, bound)
    return params


if __name__ == "__main__":
    # Small shapes consistent with the module's forward:
    batch, seq_len, input_size = 2, 8, 16
    hidden_size, num_layers, num_classes = 32, 2, 10

    key = jax.random.PRNGKey(0)
    key, kx = jax.random.split(key)
    x = jax.random.normal(kx, (batch, seq_len, input_size), jnp.float32)
    params = init_params(key, input_size, hidden_size, num_layers, num_classes)

    fwd = jax.jit(rnn_forward)           # f32 MXU path (matches PyTorch numerics)
    out = fwd(x, params)
    jax.block_until_ready(out)
    assert out.shape == (batch, num_classes)

    ref = rnn_reference(x, params)
    max_diff = float(jnp.max(jnp.abs(out - ref)))
    assert max_diff < 5e-2, f"mismatch vs pure-JAX reference: {max_diff}"
    print("KERNEL_OK")
</pallas_src>

<mosaic_0001>
module attributes {stable_mosaic.version = 11 : i64} {
  func.func @fused_rnn_kernel(%arg0: memref<2x8x16xf32, #tpu.memory_space<vmem>>, %arg1: memref<16x128xf32, #tpu.memory_space<vmem>>, %arg2: memref<32x128xf32, #tpu.memory_space<vmem>>, %arg3: memref<1x128xf32, #tpu.memory_space<vmem>>, %arg4: memref<32x128xf32, #tpu.memory_space<vmem>>, %arg5: memref<32x128xf32, #tpu.memory_space<vmem>>, %arg6: memref<1x128xf32, #tpu.memory_space<vmem>>, %arg7: memref<32x10xf32, #tpu.memory_space<vmem>>, %arg8: memref<1x10xf32, #tpu.memory_space<vmem>>, %arg9: memref<2x10xf32, #tpu.memory_space<vmem>>, %arg10: memref<16x16xf32, #tpu.memory_space<vmem>>, %arg11: memref<16x32xf32, #tpu.memory_space<vmem>>) attributes {dimension_semantics = [], scalar_prefetch = 0 : i64, scratch_operands = 2 : i64, tpu.core_type = #tpu.core_type<tc>} {
    %c0 = arith.constant 0 : index
    %c0_0 = arith.constant 0 : index
    %c0_1 = arith.constant 0 : index
    %0 = vector.load %arg0[%c0, %c0_0, %c0_1] : memref<2x8x16xf32, #tpu.memory_space<vmem>>, vector<2x1x16xf32>
    %1 = vector.shape_cast %0 : vector<2x1x16xf32> to vector<2x16xf32>
    %c0_2 = arith.constant 0 : index
    %c0_3 = arith.constant 0 : index
    %2 = vector.load %arg10[%c0_2, %c0_3] : memref<16x16xf32, #tpu.memory_space<vmem>>, vector<2x16xf32>
    tpu.vector_store %arg10[%c0_2, %c0_3], %1 {strides = array<i32>} : memref<16x16xf32, #tpu.memory_space<vmem>>, vector<2x16xf32>,
    %c0_4 = arith.constant 0 : index
    %c1 = arith.constant 1 : index
    %c0_5 = arith.constant 0 : index
    %3 = vector.load %arg0[%c0_4, %c1, %c0_5] : memref<2x8x16xf32, #tpu.memory_space<vmem>>, vector<2x1x16xf32>
    %4 = vector.shape_cast %3 : vector<2x1x16xf32> to vector<2x16xf32>
    %c2 = arith.constant 2 : index
    %c0_6 = arith.constant 0 : index
    %5 = vector.load %arg10[%c2, %c0_6] : memref<16x16xf32, #tpu.memory_space<vmem>>, vector<2x16xf32>
    tpu.vector_store %arg10[%c2, %c0_6], %4 {strides = array<i32>} : memref<16x16xf32, #tpu.memory_space<vmem>>, vector<2x16xf32>,
    %c0_7 = arith.constant 0 : index
    %c2_8 = arith.constant 2 : index
    %c0_9 = arith.constant 0 : index
    %6 = vector.load %arg0[%c0_7, %c2_8, %c0_9] : memref<2x8x16xf32, #tpu.memory_space<vmem>>, vector<2x1x16xf32>
    %7 = vector.shape_cast %6 : vector<2x1x16xf32> to vector<2x16xf32>
    %c4 = arith.constant 4 : index
    %c0_10 = arith.constant 0 : index
    %8 = vector.load %arg10[%c4, %c0_10] : memref<16x16xf32, #tpu.memory_space<vmem>>, vector<2x16xf32>
    tpu.vector_store %arg10[%c4, %c0_10], %7 {strides = array<i32>} : memref<16x16xf32, #tpu.memory_space<vmem>>, vector<2x16xf32>,
    %c0_11 = arith.constant 0 : index
    %c3 = arith.constant 3 : index
    %c0_12 = arith.constant 0 : index
    %9 = vector.load %arg0[%c0_11, %c3, %c0_12] : memref<2x8x16xf32, #tpu.memory_space<vmem>>, vector<2x1x16xf32>
    %10 = vector.shape_cast %9 : vector<2x1x16xf32> to vector<2x16xf32>
    %c6 = arith.constant 6 : index
    %c0_13 = arith.constant 0 : index
    %11 = vector.load %arg10[%c6, %c0_13] : memref<16x16xf32, #tpu.memory_space<vmem>>, vector<2x16xf32>
    tpu.vector_store %arg10[%c6, %c0_13], %10 {strides = array<i32>} : memref<16x16xf32, #tpu.memory_space<vmem>>, vector<2x16xf32>,
    %c0_14 = arith.constant 0 : index
    %c4_15 = arith.constant 4 : index
    %c0_16 = arith.constant 0 : index
    %12 = vector.load %arg0[%c0_14, %c4_15, %c0_16] : memref<2x8x16xf32, #tpu.memory_space<vmem>>, vector<2x1x16xf32>
    %13 = vector.shape_cast %12 : vector<2x1x16xf32> to vector<2x16xf32>
    %c8 = arith.constant 8 : index
    %c0_17 = arith.constant 0 : index
    %14 = vector.load %arg10[%c8, %c0_17] : memref<16x16xf32, #tpu.memory_space<vmem>>, vector<2x16xf32>
    tpu.vector_store %arg10[%c8, %c0_17], %13 {strides = array<i32>} : memref<16x16xf32, #tpu.memory_space<vmem>>, vector<2x16xf32>,
    %c0_18 = arith.constant 0 : index
    %c5 = arith.constant 5 : index
    %c0_19 = arith.constant 0 : index
    %15 = vector.load %arg0[%c0_18, %c5, %c0_19] : memref<2x8x16xf32, #tpu.memory_space<vmem>>, vector<2x1x16xf32>
    %16 = vector.shape_cast %15 : vector<2x1x16xf32> to vector<2x16xf32>
    %c10 = arith.constant 10 : index
    %c0_20 = arith.constant 0 : index
    %17 = vector.load %arg10[%c10, %c0_20] : memref<16x16xf32, #tpu.memory_space<vmem>>, vector<2x16xf32>
    tpu.vector_store %arg10[%c10, %c0_20], %16 {strides = array<i32>} : memref<16x16xf32, #tpu.memory_space<vmem>>, vector<2x16xf32>,
    %c0_21 = arith.constant 0 : index
    %c6_22 = arith.constant 6 : index
    %c0_23 = arith.constant 0 : index
    %18 = vector.load %arg0[%c0_21, %c6_22, %c0_23] : memref<2x8x16xf32, #tpu.memory_space<vmem>>, vector<2x1x16xf32>
    %19 = vector.shape_cast %18 : vector<2x1x16xf32> to vector<2x16xf32>
    %c12 = arith.constant 12 : index
    %c0_24 = arith.constant 0 : index
    %20 = vector.load %arg10[%c12, %c0_24] : memref<16x16xf32, #tpu.memory_space<vmem>>, vector<2x16xf32>
    tpu.vector_store %arg10[%c12, %c0_24], %19 {strides = array<i32>} : memref<16x16xf32, #tpu.memory_space<vmem>>, vector<2x16xf32>,
    %c0_25 = arith.constant 0 : index
    %c7 = arith.constant 7 : index
    %c0_26 = arith.constant 0 : index
    %21 = vector.load %arg0[%c0_25, %c7, %c0_26] : memref<2x8x16xf32, #tpu.memory_space<vmem>>, vector<2x1x16xf32>
    %22 = vector.shape_cast %21 : vector<2x1x16xf32> to vector<2x16xf32>
    %c14 = arith.constant 14 : index
    %c0_27 = arith.constant 0 : index
    %23 = vector.load %arg10[%c14, %c0_27] : memref<16x16xf32, #tpu.memory_space<vmem>>, vector<2x16xf32>
    tpu.vector_store %arg10[%c14, %c0_27], %22 {strides = array<i32>} : memref<16x16xf32, #tpu.memory_space<vmem>>, vector<2x16xf32>,
    %c0_28 = arith.constant 0 : index
    %c0_29 = arith.constant 0 : index
    %24 = vector.load %arg10[%c0_28, %c0_29] : memref<16x16xf32, #tpu.memory_space<vmem>>, vector<16x16xf32>
    %c0_30 = arith.constant 0 : index
    %c0_31 = arith.constant 0 : index
    %25 = vector.load %arg1[%c0_30, %c0_31] : memref<16x128xf32, #tpu.memory_space<vmem>>, vector<16x128xf32>
    %cst = arith.constant dense<0.000000e+00> : vector<16x128xf32>
    %26 = tpu.matmul %24, %25, %cst {dimension_numbers = #tpu.dot_dimension_numbers<[1], [0], [0], [1], [0, 0, 1, 1], [], []>} : vector<16x16xf32>, vector<16x128xf32>, vector<16x128xf32> -> vector<16x128xf32>
    %c0_32 = arith.constant 0 : index
    %c0_33 = arith.constant 0 : index
    %27 = vector.load %arg3[%c0_32, %c0_33] : memref<1x128xf32, #tpu.memory_space<vmem>>, vector<1x128xf32>
    %28 = vector.broadcast %27 : vector<1x128xf32> to vector<16x128xf32>
    %29 = arith.addf %26, %28 : vector<16x128xf32>
    %c0_34 = arith.constant 0 : index
    %c0_35 = arith.constant 0 : index
    %30 = vector.load %arg2[%c0_34, %c0_35] : memref<32x128xf32, #tpu.memory_space<vmem>>, vector<32x128xf32>
    %cst_36 = arith.constant 0.000000e+00 : f32
    %31 = vector.broadcast %cst_36 : f32 to vector<2x32xf32>
    %cst_37 = arith.constant 0.000000e+00 : f32
    %32 = vector.broadcast %cst_37 : f32 to vector<2x32xf32>
    %33 = vector.extract_strided_slice %29 {offsets = [0, 0], sizes = [2, 128], strides = [1, 1]} : vector<16x128xf32> to vector<2x128xf32>
    %cst_38 = arith.constant dense<0.000000e+00> : vector<2x128xf32>
    %34 = tpu.matmul %31, %30, %cst_38 {dimension_numbers = #tpu.dot_dimension_numbers<[1], [0], [0], [1], [0, 0, 1, 1], [], []>} : vector<2x32xf32>, vector<32x128xf32>, vector<2x128xf32> -> vector<2x128xf32>
    %35 = arith.addf %33, %34 : vector<2x128xf32>
    %36 = arith.negf %35 : vector<2x128xf32>
    %37 = math.exp %36 : vector<2x128xf32>
    %cst_39 = arith.constant 1.000000e+00 : f32
    %38 = vector.broadcast %cst_39 : f32 to vector<2x128xf32>
    %39 = arith.addf %38, %37 : vector<2x128xf32>
    %40 = arith.divf %38, %39 : vector<2x128xf32>
    %41 = math.tanh %35 : vector<2x128xf32>
    %42 = vector.extract_strided_slice %40 {offsets = [0, 0], sizes = [2, 32], strides = [1, 1]} : vector<2x128xf32> to vector<2x32xf32>
    %43 = vector.extract_strided_slice %40 {offsets = [0, 32], sizes = [2, 32], strides = [1, 1]} : vector<2x128xf32> to vector<2x32xf32>
    %44 = vector.extract_strided_slice %41 {offsets = [0, 64], sizes = [2, 32], strides = [1, 1]} : vector<2x128xf32> to vector<2x32xf32>
    %45 = vector.extract_strided_slice %40 {offsets = [0, 96], sizes = [2, 32], strides = [1, 1]} : vector<2x128xf32> to vector<2x32xf32>
    %46 = arith.mulf %43, %32 : vector<2x32xf32>
    %47 = arith.mulf %42, %44 : vector<2x32xf32>
    %48 = arith.addf %46, %47 : vector<2x32xf32>
    %49 = math.tanh %48 : vector<2x32xf32>
    %50 = arith.mulf %45, %49 : vector<2x32xf32>
    %c0_40 = arith.constant 0 : index
    %c0_41 = arith.constant 0 : index
    %51 = vector.load %arg11[%c0_40, %c0_41] : memref<16x32xf32, #tpu.memory_space<vmem>>, vector<2x32xf32>
    tpu.vector_store %arg11[%c0_40, %c0_41], %50 {strides = array<i32>} : memref<16x32xf32, #tpu.memory_space<vmem>>, vector<2x32xf32>,
    %52 = vector.extract_strided_slice %29 {offsets = [2, 0], sizes = [2, 128], strides = [1, 1]} : vector<16x128xf32> to vector<2x128xf32>
    %cst_42 = arith.constant dense<0.000000e+00> : vector<2x128xf32>
    %53 = tpu.matmul %50, %30, %cst_42 {dimension_numbers = #tpu.dot_dimension_numbers<[1], [0], [0], [1], [0, 0, 1, 1], [], []>} : vector<2x32xf32>, vector<32x128xf32>, vector<2x128xf32> -> vector<2x128xf32>
    %54 = arith.addf %52, %53 : vector<2x128xf32>
    %55 = arith.negf %54 : vector<2x128xf32>
    %56 = math.exp %55 : vector<2x128xf32>
    %cst_43 = arith.constant 1.000000e+00 : f32
    %57 = vector.broadcast %cst_43 : f32 to vector<2x128xf32>
    %58 = arith.addf %57, %56 : vector<2x128xf32>
    %59 = arith.divf %57, %58 : vector<2x128xf32>
    %60 = math.tanh %54 : vector<2x128xf32>
    %61 = vector.extract_strided_slice %59 {offsets = [0, 0], sizes = [2, 32], strides = [1, 1]} : vector<2x128xf32> to vector<2x32xf32>
    %62 = vector.extract_strided_slice %59 {offsets = [0, 32], sizes = [2, 32], strides = [1, 1]} : vector<2x128xf32> to vector<2x32xf32>
    %63 = vector.extract_strided_slice %60 {offsets = [0, 64], sizes = [2, 32], strides = [1, 1]} : vector<2x128xf32> to vector<2x32xf32>
    %64 = vector.extract_strided_slice %59 {offsets = [0, 96], sizes = [2, 32], strides = [1, 1]} : vector<2x128xf32> to vector<2x32xf32>
    %65 = arith.mulf %62, %48 : vector<2x32xf32>
    %66 = arith.mulf %61, %63 : vector<2x32xf32>
    %67 = arith.addf %65, %66 : vector<2x32xf32>
    %68 = math.tanh %67 : vector<2x32xf32>
    %69 = arith.mulf %64, %68 : vector<2x32xf32>
    %c2_44 = arith.constant 2 : index
    %c0_45 = arith.constant 0 : index
    %70 = vector.load %arg11[%c2_44, %c0_45] : memref<16x32xf32, #tpu.memory_space<vmem>>, vector<2x32xf32>
    tpu.vector_store %arg11[%c2_44, %c0_45], %69 {strides = array<i32>} : memref<16x32xf32, #tpu.memory_space<vmem>>, vector<2x32xf32>,
    %71 = vector.extract_strided_slice %29 {offsets = [4, 0], sizes = [2, 128], strides = [1, 1]} : vector<16x128xf32> to vector<2x128xf32>
    %cst_46 = arith.constant dense<0.000000e+00> : vector<2x128xf32>
    %72 = tpu.matmul %69, %30, %cst_46 {dimension_numbers = #tpu.dot_dimension_numbers<[1], [0], [0], [1], [0, 0, 1, 1], [], []>} : vector<2x32xf32>, vector<32x128xf32>, vector<2x128xf32> -> vector<2x128xf32>
    %73 = arith.addf %71, %72 : vector<2x128xf32>
    %74 = arith.negf %73 : vector<2x128xf32>
    %75 = math.exp %74 : vector<2x128xf32>
    %cst_47 = arith.constant 1.000000e+00 : f32
    %76 = vector.broadcast %cst_47 : f32 to vector<2x128xf32>
    %77 = arith.addf %76, %75 : vector<2x128xf32>
    %78 = arith.divf %76, %77 : vector<2x128xf32>
    %79 = math.tanh %73 : vector<2x128xf32>
    %80 = vector.extract_strided_slice %78 {offsets = [0, 0], sizes = [2, 32], strides = [1, 1]} : vector<2x128xf32> to vector<2x32xf32>
    %81 = vector.extract_strided_slice %78 {offsets = [0, 32], sizes = [2, 32], strides = [1, 1]} : vector<2x128xf32> to vector<2x32xf32>
    %82 = vector.extract_strided_slice %79 {offsets = [0, 64], sizes = [2, 32], strides = [1, 1]} : vector<2x128xf32> to vector<2x32xf32>
    %83 = vector.extract_strided_slice %78 {offsets = [0, 96], sizes = [2, 32], strides = [1, 1]} : vector<2x128xf32> to vector<2x32xf32>
    %84 = arith.mulf %81, %67 : vector<2x32xf32>
    %85 = arith.mulf %80, %82 : vector<2x32xf32>
    %86 = arith.addf %84, %85 : vector<2x32xf32>
    %87 = math.tanh %86 : vector<2x32xf32>
    %88 = arith.mulf %83, %87 : vector<2x32xf32>
    %c4_48 = arith.constant 4 : index
    %c0_49 = arith.constant 0 : index
    %89 = vector.load %arg11[%c4_48, %c0_49] : memref<16x32xf32, #tpu.memory_space<vmem>>, vector<2x32xf32>
    tpu.vector_store %arg11[%c4_48, %c0_49], %88 {strides = array<i32>} : memref<16x32xf32, #tpu.memory_space<vmem>>, vector<2x32xf32>,
    %90 = vector.extract_strided_slice %29 {offsets = [6, 0], sizes = [2, 128], strides = [1, 1]} : vector<16x128xf32> to vector<2x128xf32>
    %cst_50 = arith.constant dense<0.000000e+00> : vector<2x128xf32>
    %91 = tpu.matmul %88, %30, %cst_50 {dimension_numbers = #tpu.dot_dimension_numbers<[1], [0], [0], [1], [0, 0, 1, 1], [], []>} : vector<2x32xf32>, vector<32x128xf32>, vector<2x128xf32> -> vector<2x128xf32>
    %92 = arith.addf %90, %91 : vector<2x128xf32>
    %93 = arith.negf %92 : vector<2x128xf32>
    %94 = math.exp %93 : vector<2x128xf32>
    %cst_51 = arith.constant 1.000000e+00 : f32
    %95 = vector.broadcast %cst_51 : f32 to vector<2x128xf32>
    %96 = arith.addf %95, %94 : vector<2x128xf32>
    %97 = arith.divf %95, %96 : vector<2x128xf32>
    %98 = math.tanh %92 : vector<2x128xf32>
    %99 = vector.extract_strided_slice %97 {offsets = [0, 0], sizes = [2, 32], strides = [1, 1]} : vector<2x128xf32> to vector<2x32xf32>
    %100 = vector.extract_strided_slice %97 {offsets = [0, 32], sizes = [2, 32], strides = [1, 1]} : vector<2x128xf32> to vector<2x32xf32>
    %101 = vector.extract_strided_slice %98 {offsets = [0, 64], sizes = [2, 32], strides = [1, 1]} : vector<2x128xf32> to vector<2x32xf32>
    %102 = vector.extract_strided_slice %97 {offsets = [0, 96], sizes = [2, 32], strides = [1, 1]} : vector<2x128xf32> to vector<2x32xf32>
    %103 = arith.mulf %100, %86 : vector<2x32xf32>
    %104 = arith.mulf %99, %101 : vector<2x32xf32>
    %105 = arith.addf %103, %104 : vector<2x32xf32>
    %106 = math.tanh %105 : vector<2x32xf32>
    %107 = arith.mulf %102, %106 : vector<2x32xf32>
    %c6_52 = arith.constant 6 : index
    %c0_53 = arith.constant 0 : index
    %108 = vector.load %arg11[%c6_52, %c0_53] : memref<16x32xf32, #tpu.memory_space<vmem>>, vector<2x32xf32>
    tpu.vector_store %arg11[%c6_52, %c0_53], %107 {strides = array<i32>} : memref<16x32xf32, #tpu.memory_space<vmem>>, vector<2x32xf32>,
    %109 = vector.extract_strided_slice %29 {offsets = [8, 0], sizes = [2, 128], strides = [1, 1]} : vector<16x128xf32> to vector<2x128xf32>
    %cst_54 = arith.constant dense<0.000000e+00> : vector<2x128xf32>
    %110 = tpu.matmul %107, %30, %cst_54 {dimension_numbers = #tpu.dot_dimension_numbers<[1], [0], [0], [1], [0, 0, 1, 1], [], []>} : vector<2x32xf32>, vector<32x128xf32>, vector<2x128xf32> -> vector<2x128xf32>
    %111 = arith.addf %109, %110 : vector<2x128xf32>
    %112 = arith.negf %111 : vector<2x128xf32>
    %113 = math.exp %112 : vector<2x128xf32>
    %cst_55 = arith.constant 1.000000e+00 : f32
    %114 = vector.broadcast %cst_55 : f32 to vector<2x128xf32>
    %115 = arith.addf %114, %113 : vector<2x128xf32>
    %116 = arith.divf %114, %115 : vector<2x128xf32>
    %117 = math.tanh %111 : vector<2x128xf32>
    %118 = vector.extract_strided_slice %116 {offsets = [0, 0], sizes = [2, 32], strides = [1, 1]} : vector<2x128xf32> to vector<2x32xf32>
    %119 = vector.extract_strided_slice %116 {offsets = [0, 32], sizes = [2, 32], strides = [1, 1]} : vector<2x128xf32> to vector<2x32xf32>
    %120 = vector.extract_strided_slice %117 {offsets = [0, 64], sizes = [2, 32], strides = [1, 1]} : vector<2x128xf32> to vector<2x32xf32>
    %121 = vector.extract_strided_slice %116 {offsets = [0, 96], sizes = [2, 32], strides = [1, 1]} : vector<2x128xf32> to vector<2x32xf32>
    %122 = arith.mulf %119, %105 : vector<2x32xf32>
    %123 = arith.mulf %118, %120 : vector<2x32xf32>
    %124 = arith.addf %122, %123 : vector<2x32xf32>
    %125 = math.tanh %124 : vector<2x32xf32>
    %126 = arith.mulf %121, %125 : vector<2x32xf32>
    %c8_56 = arith.constant 8 : index
    %c0_57 = arith.constant 0 : index
    %127 = vector.load %arg11[%c8_56, %c0_57] : memref<16x32xf32, #tpu.memory_space<vmem>>, vector<2x32xf32>
    tpu.vector_store %arg11[%c8_56, %c0_57], %126 {strides = array<i32>} : memref<16x32xf32, #tpu.memory_space<vmem>>, vector<2x32xf32>,
    %128 = vector.extract_strided_slice %29 {offsets = [10, 0], sizes = [2, 128], strides = [1, 1]} : vector<16x128xf32> to vector<2x128xf32>
    %cst_58 = arith.constant dense<0.000000e+00> : vector<2x128xf32>
    %129 = tpu.matmul %126, %30, %cst_58 {dimension_numbers = #tpu.dot_dimension_numbers<[1], [0], [0], [1], [0, 0, 1, 1], [], []>} : vector<2x32xf32>, vector<32x128xf32>, vector<2x128xf32> -> vector<2x128xf32>
    %130 = arith.addf %128, %129 : vector<2x128xf32>
    %131 = arith.negf %130 : vector<2x128xf32>
    %132 = math.exp %131 : vector<2x128xf32>
    %cst_59 = arith.constant 1.000000e+00 : f32
    %133 = vector.broadcast %cst_59 : f32 to vector<2x128xf32>
    %134 = arith.addf %133, %132 : vector<2x128xf32>
    %135 = arith.divf %133, %134 : vector<2x128xf32>
    %136 = math.tanh %130 : vector<2x128xf32>
    %137 = vector.extract_strided_slice %135 {offsets = [0, 0], sizes = [2, 32], strides = [1, 1]} : vector<2x128xf32> to vector<2x32xf32>
    %138 = vector.extract_strided_slice %135 {offsets = [0, 32], sizes = [2, 32], strides = [1, 1]} : vector<2x128xf32> to vector<2x32xf32>
    %139 = vector.extract_strided_slice %136 {offsets = [0, 64], sizes = [2, 32], strides = [1, 1]} : vector<2x128xf32> to vector<2x32xf32>
    %140 = vector.extract_strided_slice %135 {offsets = [0, 96], sizes = [2, 32], strides = [1, 1]} : vector<2x128xf32> to vector<2x32xf32>
    %141 = arith.mulf %138, %124 : vector<2x32xf32>
    %142 = arith.mulf %137, %139 : vector<2x32xf32>
    %143 = arith.addf %141, %142 : vector<2x32xf32>
    %144 = math.tanh %143 : vector<2x32xf32>
    %145 = arith.mulf %140, %144 : vector<2x32xf32>
    %c10_60 = arith.constant 10 : index
    %c0_61 = arith.constant 0 : index
    %146 = vector.load %arg11[%c10_60, %c0_61] : memref<16x32xf32, #tpu.memory_space<vmem>>, vector<2x32xf32>
    tpu.vector_store %arg11[%c10_60, %c0_61], %145 {strides = array<i32>} : memref<16x32xf32, #tpu.memory_space<vmem>>, vector<2x32xf32>,
    %147 = vector.extract_strided_slice %29 {offsets = [12, 0], sizes = [2, 128], strides = [1, 1]} : vector<16x128xf32> to vector<2x128xf32>
    %cst_62 = arith.constant dense<0.000000e+00> : vector<2x128xf32>
    %148 = tpu.matmul %145, %30, %cst_62 {dimension_numbers = #tpu.dot_dimension_numbers<[1], [0], [0], [1], [0, 0, 1, 1], [], []>} : vector<2x32xf32>, vector<32x128xf32>, vector<2x128xf32> -> vector<2x128xf32>
    %149 = arith.addf %147, %148 : vector<2x128xf32>
    %150 = arith.negf %149 : vector<2x128xf32>
    %151 = math.exp %150 : vector<2x128xf32>
    %cst_63 = arith.constant 1.000000e+00 : f32
    %152 = vector.broadcast %cst_63 : f32 to vector<2x128xf32>
    %153 = arith.addf %152, %151 : vector<2x128xf32>
    %154 = arith.divf %152, %153 : vector<2x128xf32>
    %155 = math.tanh %149 : vector<2x128xf32>
    %156 = vector.extract_strided_slice %154 {offsets = [0, 0], sizes = [2, 32], strides = [1, 1]} : vector<2x128xf32> to vector<2x32xf32>
    %157 = vector.extract_strided_slice %154 {offsets = [0, 32], sizes = [2, 32], strides = [1, 1]} : vector<2x128xf32> to vector<2x32xf32>
    %158 = vector.extract_strided_slice %155 {offsets = [0, 64], sizes = [2, 32], strides = [1, 1]} : vector<2x128xf32> to vector<2x32xf32>
    %159 = vector.extract_strided_slice %154 {offsets = [0, 96], sizes = [2, 32], strides = [1, 1]} : vector<2x128xf32> to vector<2x32xf32>
    %160 = arith.mulf %157, %143 : vector<2x32xf32>
    %161 = arith.mulf %156, %158 : vector<2x32xf32>
    %162 = arith.addf %160, %161 : vector<2x32xf32>
    %163 = math.tanh %162 : vector<2x32xf32>
    %164 = arith.mulf %159, %163 : vector<2x32xf32>
    %c12_64 = arith.constant 12 : index
    %c0_65 = arith.constant 0 : index
    %165 = vector.load %arg11[%c12_64, %c0_65] : memref<16x32xf32, #tpu.memory_space<vmem>>, vector<2x32xf32>
    tpu.vector_store %arg11[%c12_64, %c0_65], %164 {strides = array<i32>} : memref<16x32xf32, #tpu.memory_space<vmem>>, vector<2x32xf32>,
    %166 = vector.extract_strided_slice %29 {offsets = [14, 0], sizes = [2, 128], strides = [1, 1]} : vector<16x128xf32> to vector<2x128xf32>
    %cst_66 = arith.constant dense<0.000000e+00> : vector<2x128xf32>
    %167 = tpu.matmul %164, %30, %cst_66 {dimension_numbers = #tpu.dot_dimension_numbers<[1], [0], [0], [1], [0, 0, 1, 1], [], []>} : vector<2x32xf32>, vector<32x128xf32>, vector<2x128xf32> -> vector<2x128xf32>
    %168 = arith.addf %166, %167 : vector<2x128xf32>
    %169 = arith.negf %168 : vector<2x128xf32>
    %170 = math.exp %169 : vector<2x128xf32>
    %cst_67 = arith.constant 1.000000e+00 : f32
    %171 = vector.broadcast %cst_67 : f32 to vector<2x128xf32>
    %172 = arith.addf %171, %170 : vector<2x128xf32>
    %173 = arith.divf %171, %172 : vector<2x128xf32>
    %174 = math.tanh %168 : vector<2x128xf32>
    %175 = vector.extract_strided_slice %173 {offsets = [0, 0], sizes = [2, 32], strides = [1, 1]} : vector<2x128xf32> to vector<2x32xf32>
    %176 = vector.extract_strided_slice %173 {offsets = [0, 32], sizes = [2, 32], strides = [1, 1]} : vector<2x128xf32> to vector<2x32xf32>
    %177 = vector.extract_strided_slice %174 {offsets = [0, 64], sizes = [2, 32], strides = [1, 1]} : vector<2x128xf32> to vector<2x32xf32>
    %178 = vector.extract_strided_slice %173 {offsets = [0, 96], sizes = [2, 32], strides = [1, 1]} : vector<2x128xf32> to vector<2x32xf32>
    %179 = arith.mulf %176, %162 : vector<2x32xf32>
    %180 = arith.mulf %175, %177 : vector<2x32xf32>
    %181 = arith.addf %179, %180 : vector<2x32xf32>
    %182 = math.tanh %181 : vector<2x32xf32>
    %183 = arith.mulf %178, %182 : vector<2x32xf32>
    %c14_68 = arith.constant 14 : index
    %c0_69 = arith.constant 0 : index
    %184 = vector.load %arg11[%c14_68, %c0_69] : memref<16x32xf32, #tpu.memory_space<vmem>>, vector<2x32xf32>
    tpu.vector_store %arg11[%c14_68, %c0_69], %183 {strides = array<i32>} : memref<16x32xf32, #tpu.memory_space<vmem>>, vector<2x32xf32>,
    %c0_70 = arith.constant 0 : index
    %c0_71 = arith.constant 0 : index
    %185 = vector.load %arg11[%c0_70, %c0_71] : memref<16x32xf32, #tpu.memory_space<vmem>>, vector<16x32xf32>
    %c0_72 = arith.constant 0 : index
    %c0_73 = arith.constant 0 : index
    %186 = vector.load %arg4[%c0_72, %c0_73] : memref<32x128xf32, #tpu.memory_space<vmem>>, vector<32x128xf32>
    %cst_74 = arith.constant dense<0.000000e+00> : vector<16x128xf32>
    %187 = tpu.matmul %185, %186, %cst_74 {dimension_numbers = #tpu.dot_dimension_numbers<[1], [0], [0], [1], [0, 0, 1, 1], [], []>} : vector<16x32xf32>, vector<32x128xf32>, vector<16x128xf32> -> vector<16x128xf32>
    %c0_75 = arith.constant 0 : index
    %c0_76 = arith.constant 0 : index
    %188 = vector.load %arg6[%c0_75, %c0_76] : memref<1x128xf32, #tpu.memory_space<vmem>>, vector<1x128xf32>
    %189 = vector.broadcast %188 : vector<1x128xf32> to vector<16x128xf32>
    %190 = arith.addf %187, %189 : vector<16x128xf32>
    %c0_77 = arith.constant 0 : index
    %c0_78 = arith.constant 0 : index
    %191 = vector.load %arg5[%c0_77, %c0_78] : memref<32x128xf32, #tpu.memory_space<vmem>>, vector<32x128xf32>
    %cst_79 = arith.constant 0.000000e+00 : f32
    %192 = vector.broadcast %cst_79 : f32 to vector<2x32xf32>
    %cst_80 = arith.constant 0.000000e+00 : f32
    %193 = vector.broadcast %cst_80 : f32 to vector<2x32xf32>
    %194 = vector.extract_strided_slice %190 {offsets = [0, 0], sizes = [2, 128], strides = [1, 1]} : vector<16x128xf32> to vector<2x128xf32>
    %cst_81 = arith.constant dense<0.000000e+00> : vector<2x128xf32>
    %195 = tpu.matmul %192, %191, %cst_81 {dimension_numbers = #tpu.dot_dimension_numbers<[1], [0], [0], [1], [0, 0, 1, 1], [], []>} : vector<2x32xf32>, vector<32x128xf32>, vector<2x128xf32> -> vector<2x128xf32>
    %196 = arith.addf %194, %195 : vector<2x128xf32>
    %197 = arith.negf %196 : vector<2x128xf32>
    %198 = math.exp %197 : vector<2x128xf32>
    %cst_82 = arith.constant 1.000000e+00 : f32
    %199 = vector.broadcast %cst_82 : f32 to vector<2x128xf32>
    %200 = arith.addf %199, %198 : vector<2x128xf32>
    %201 = arith.divf %199, %200 : vector<2x128xf32>
    %202 = math.tanh %196 : vector<2x128xf32>
    %203 = vector.extract_strided_slice %201 {offsets = [0, 0], sizes = [2, 32], strides = [1, 1]} : vector<2x128xf32> to vector<2x32xf32>
    %204 = vector.extract_strided_slice %201 {offsets = [0, 32], sizes = [2, 32], strides = [1, 1]} : vector<2x128xf32> to vector<2x32xf32>
    %205 = vector.extract_strided_slice %202 {offsets = [0, 64], sizes = [2, 32], strides = [1, 1]} : vector<2x128xf32> to vector<2x32xf32>
    %206 = vector.extract_strided_slice %201 {offsets = [0, 96], sizes = [2, 32], strides = [1, 1]} : vector<2x128xf32> to vector<2x32xf32>
    %207 = arith.mulf %204, %193 : vector<2x32xf32>
    %208 = arith.mulf %203, %205 : vector<2x32xf32>
    %209 = arith.addf %207, %208 : vector<2x32xf32>
    %210 = math.tanh %209 : vector<2x32xf32>
    %211 = arith.mulf %206, %210 : vector<2x32xf32>
    %212 = vector.extract_strided_slice %190 {offsets = [2, 0], sizes = [2, 128], strides = [1, 1]} : vector<16x128xf32> to vector<2x128xf32>
    %cst_83 = arith.constant dense<0.000000e+00> : vector<2x128xf32>
    %213 = tpu.matmul %211, %191, %cst_83 {dimension_numbers = #tpu.dot_dimension_numbers<[1], [0], [0], [1], [0, 0, 1, 1], [], []>} : vector<2x32xf32>, vector<32x128xf32>, vector<2x128xf32> -> vector<2x128xf32>
    %214 = arith.addf %212, %213 : vector<2x128xf32>
    %215 = arith.negf %214 : vector<2x128xf32>
    %216 = math.exp %215 : vector<2x128xf32>
    %cst_84 = arith.constant 1.000000e+00 : f32
    %217 = vector.broadcast %cst_84 : f32 to vector<2x128xf32>
    %218 = arith.addf %217, %216 : vector<2x128xf32>
    %219 = arith.divf %217, %218 : vector<2x128xf32>
    %220 = math.tanh %214 : vector<2x128xf32>
    %221 = vector.extract_strided_slice %219 {offsets = [0, 0], sizes = [2, 32], strides = [1, 1]} : vector<2x128xf32> to vector<2x32xf32>
    %222 = vector.extract_strided_slice %219 {offsets = [0, 32], sizes = [2, 32], strides = [1, 1]} : vector<2x128xf32> to vector<2x32xf32>
    %223 = vector.extract_strided_slice %220 {offsets = [0, 64], sizes = [2, 32], strides = [1, 1]} : vector<2x128xf32> to vector<2x32xf32>
    %224 = vector.extract_strided_slice %219 {offsets = [0, 96], sizes = [2, 32], strides = [1, 1]} : vector<2x128xf32> to vector<2x32xf32>
    %225 = arith.mulf %222, %209 : vector<2x32xf32>
    %226 = arith.mulf %221, %223 : vector<2x32xf32>
    %227 = arith.addf %225, %226 : vector<2x32xf32>
    %228 = math.tanh %227 : vector<2x32xf32>
    %229 = arith.mulf %224, %228 : vector<2x32xf32>
    %230 = vector.extract_strided_slice %190 {offsets = [4, 0], sizes = [2, 128], strides = [1, 1]} : vector<16x128xf32> to vector<2x128xf32>
    %cst_85 = arith.constant dense<0.000000e+00> : vector<2x128xf32>
    %231 = tpu.matmul %229, %191, %cst_85 {dimension_numbers = #tpu.dot_dimension_numbers<[1], [0], [0], [1], [0, 0, 1, 1], [], []>} : vector<2x32xf32>, vector<32x128xf32>, vector<2x128xf32> -> vector<2x128xf32>
    %232 = arith.addf %230, %231 : vector<2x128xf32>
    %233 = arith.negf %232 : vector<2x128xf32>
    %234 = math.exp %233 : vector<2x128xf32>
    %cst_86 = arith.constant 1.000000e+00 : f32
    %235 = vector.broadcast %cst_86 : f32 to vector<2x128xf32>
    %236 = arith.addf %235, %234 : vector<2x128xf32>
    %237 = arith.divf %235, %236 : vector<2x128xf32>
    %238 = math.tanh %232 : vector<2x128xf32>
    %239 = vector.extract_strided_slice %237 {offsets = [0, 0], sizes = [2, 32], strides = [1, 1]} : vector<2x128xf32> to vector<2x32xf32>
    %240 = vector.extract_strided_slice %237 {offsets = [0, 32], sizes = [2, 32], strides = [1, 1]} : vector<2x128xf32> to vector<2x32xf32>
    %241 = vector.extract_strided_slice %238 {offsets = [0, 64], sizes = [2, 32], strides = [1, 1]} : vector<2x128xf32> to vector<2x32xf32>
    %242 = vector.extract_strided_slice %237 {offsets = [0, 96], sizes = [2, 32], strides = [1, 1]} : vector<2x128xf32> to vector<2x32xf32>
    %243 = arith.mulf %240, %227 : vector<2x32xf32>
    %244 = arith.mulf %239, %241 : vector<2x32xf32>
    %245 = arith.addf %243, %244 : vector<2x32xf32>
    %246 = math.tanh %245 : vector<2x32xf32>
    %247 = arith.mulf %242, %246 : vector<2x32xf32>
    %248 = vector.extract_strided_slice %190 {offsets = [6, 0], sizes = [2, 128], strides = [1, 1]} : vector<16x128xf32> to vector<2x128xf32>
    %cst_87 = arith.constant dense<0.000000e+00> : vector<2x128xf32>
    %249 = tpu.matmul %247, %191, %cst_87 {dimension_numbers = #tpu.dot_dimension_numbers<[1], [0], [0], [1], [0, 0, 1, 1], [], []>} : vector<2x32xf32>, vector<32x128xf32>, vector<2x128xf32> -> vector<2x128xf32>
    %250 = arith.addf %248, %249 : vector<2x128xf32>
    %251 = arith.negf %250 : vector<2x128xf32>
    %252 = math.exp %251 : vector<2x128xf32>
    %cst_88 = arith.constant 1.000000e+00 : f32
    %253 = vector.broadcast %cst_88 : f32 to vector<2x128xf32>
    %254 = arith.addf %253, %252 : vector<2x128xf32>
    %255 = arith.divf %253, %254 : vector<2x128xf32>
    %256 = math.tanh %250 : vector<2x128xf32>
    %257 = vector.extract_strided_slice %255 {offsets = [0, 0], sizes = [2, 32], strides = [1, 1]} : vector<2x128xf32> to vector<2x32xf32>
    %258 = vector.extract_strided_slice %255 {offsets = [0, 32], sizes = [2, 32], strides = [1, 1]} : vector<2x128xf32> to vector<2x32xf32>
    %259 = vector.extract_strided_slice %256 {offsets = [0, 64], sizes = [2, 32], strides = [1, 1]} : vector<2x128xf32> to vector<2x32xf32>
    %260 = vector.extract_strided_slice %255 {offsets = [0, 96], sizes = [2, 32], strides = [1, 1]} : vector<2x128xf32> to vector<2x32xf32>
    %261 = arith.mulf %258, %245 : vector<2x32xf32>
    %262 = arith.mulf %257, %259 : vector<2x32xf32>
    %263 = arith.addf %261, %262 : vector<2x32xf32>
    %264 = math.tanh %263 : vector<2x32xf32>
    %265 = arith.mulf %260, %264 : vector<2x32xf32>
    %266 = vector.extract_strided_slice %190 {offsets = [8, 0], sizes = [2, 128], strides = [1, 1]} : vector<16x128xf32> to vector<2x128xf32>
    %cst_89 = arith.constant dense<0.000000e+00> : vector<2x128xf32>
    %267 = tpu.matmul %265, %191, %cst_89 {dimension_numbers = #tpu.dot_dimension_numbers<[1], [0], [0], [1], [0, 0, 1, 1], [], []>} : vector<2x32xf32>, vector<32x128xf32>, vector<2x128xf32> -> vector<2x128xf32>
    %268 = arith.addf %266, %267 : vector<2x128xf32>
    %269 = arith.negf %268 : vector<2x128xf32>
    %270 = math.exp %269 : vector<2x128xf32>
    %cst_90 = arith.constant 1.000000e+00 : f32
    %271 = vector.broadcast %cst_90 : f32 to vector<2x128xf32>
    %272 = arith.addf %271, %270 : vector<2x128xf32>
    %273 = arith.divf %271, %272 : vector<2x128xf32>
    %274 = math.tanh %268 : vector<2x128xf32>
    %275 = vector.extract_strided_slice %273 {offsets = [0, 0], sizes = [2, 32], strides = [1, 1]} : vector<2x128xf32> to vector<2x32xf32>
    %276 = vector.extract_strided_slice %273 {offsets = [0, 32], sizes = [2, 32], strides = [1, 1]} : vector<2x128xf32> to vector<2x32xf32>
    %277 = vector.extract_strided_slice %274 {offsets = [0, 64], sizes = [2, 32], strides = [1, 1]} : vector<2x128xf32> to vector<2x32xf32>
    %278 = vector.extract_strided_slice %273 {offsets = [0, 96], sizes = [2, 32], strides = [1, 1]} : vector<2x128xf32> to vector<2x32xf32>
    %279 = arith.mulf %276, %263 : vector<2x32xf32>
    %280 = arith.mulf %275, %277 : vector<2x32xf32>
    %281 = arith.addf %279, %280 : vector<2x32xf32>
    %282 = math.tanh %281 : vector<2x32xf32>
    %283 = arith.mulf %278, %282 : vector<2x32xf32>
    %284 = vector.extract_strided_slice %190 {offsets = [10, 0], sizes = [2, 128], strides = [1, 1]} : vector<16x128xf32> to vector<2x128xf32>
    %cst_91 = arith.constant dense<0.000000e+00> : vector<2x128xf32>
    %285 = tpu.matmul %283, %191, %cst_91 {dimension_numbers = #tpu.dot_dimension_numbers<[1], [0], [0], [1], [0, 0, 1, 1], [], []>} : vector<2x32xf32>, vector<32x128xf32>, vector<2x128xf32> -> vector<2x128xf32>
    %286 = arith.addf %284, %285 : vector<2x128xf32>
    %287 = arith.negf %286 : vector<2x128xf32>
    %288 = math.exp %287 : vector<2x128xf32>
    %cst_92 = arith.constant 1.000000e+00 : f32
    %289 = vector.broadcast %cst_92 : f32 to vector<2x128xf32>
    %290 = arith.addf %289, %288 : vector<2x128xf32>
    %291 = arith.divf %289, %290 : vector<2x128xf32>
    %292 = math.tanh %286 : vector<2x128xf32>
    %293 = vector.extract_strided_slice %291 {offsets = [0, 0], sizes = [2, 32], strides = [1, 1]} : vector<2x128xf32> to vector<2x32xf32>
    %294 = vector.extract_strided_slice %291 {offsets = [0, 32], sizes = [2, 32], strides = [1, 1]} : vector<2x128xf32> to vector<2x32xf32>
    %295 = vector.extract_strided_slice %292 {offsets = [0, 64], sizes = [2, 32], strides = [1, 1]} : vector<2x128xf32> to vector<2x32xf32>
    %296 = vector.extract_strided_slice %291 {offsets = [0, 96], sizes = [2, 32], strides = [1, 1]} : vector<2x128xf32> to vector<2x32xf32>
    %297 = arith.mulf %294, %281 : vector<2x32xf32>
    %298 = arith.mulf %293, %295 : vector<2x32xf32>
    %299 = arith.addf %297, %298 : vector<2x32xf32>
    %300 = math.tanh %299 : vector<2x32xf32>
    %301 = arith.mulf %296, %300 : vector<2x32xf32>
    %302 = vector.extract_strided_slice %190 {offsets = [12, 0], sizes = [2, 128], strides = [1, 1]} : vector<16x128xf32> to vector<2x128xf32>
    %cst_93 = arith.constant dense<0.000000e+00> : vector<2x128xf32>
    %303 = tpu.matmul %301, %191, %cst_93 {dimension_numbers = #tpu.dot_dimension_numbers<[1], [0], [0], [1], [0, 0, 1, 1], [], []>} : vector<2x32xf32>, vector<32x128xf32>, vector<2x128xf32> -> vector<2x128xf32>
    %304 = arith.addf %302, %303 : vector<2x128xf32>
    %305 = arith.negf %304 : vector<2x128xf32>
    %306 = math.exp %305 : vector<2x128xf32>
    %cst_94 = arith.constant 1.000000e+00 : f32
    %307 = vector.broadcast %cst_94 : f32 to vector<2x128xf32>
    %308 = arith.addf %307, %306 : vector<2x128xf32>
    %309 = arith.divf %307, %308 : vector<2x128xf32>
    %310 = math.tanh %304 : vector<2x128xf32>
    %311 = vector.extract_strided_slice %309 {offsets = [0, 0], sizes = [2, 32], strides = [1, 1]} : vector<2x128xf32> to vector<2x32xf32>
    %312 = vector.extract_strided_slice %309 {offsets = [0, 32], sizes = [2, 32], strides = [1, 1]} : vector<2x128xf32> to vector<2x32xf32>
    %313 = vector.extract_strided_slice %310 {offsets = [0, 64], sizes = [2, 32], strides = [1, 1]} : vector<2x128xf32> to vector<2x32xf32>
    %314 = vector.extract_strided_slice %309 {offsets = [0, 96], sizes = [2, 32], strides = [1, 1]} : vector<2x128xf32> to vector<2x32xf32>
    %315 = arith.mulf %312, %299 : vector<2x32xf32>
    %316 = arith.mulf %311, %313 : vector<2x32xf32>
    %317 = arith.addf %315, %316 : vector<2x32xf32>
    %318 = math.tanh %317 : vector<2x32xf32>
    %319 = arith.mulf %314, %318 : vector<2x32xf32>
    %320 = vector.extract_strided_slice %190 {offsets = [14, 0], sizes = [2, 128], strides = [1, 1]} : vector<16x128xf32> to vector<2x128xf32>
    %cst_95 = arith.constant dense<0.000000e+00> : vector<2x128xf32>
    %321 = tpu.matmul %319, %191, %cst_95 {dimension_numbers = #tpu.dot_dimension_numbers<[1], [0], [0], [1], [0, 0, 1, 1], [], []>} : vector<2x32xf32>, vector<32x128xf32>, vector<2x128xf32> -> vector<2x128xf32>
    %322 = arith.addf %320, %321 : vector<2x128xf32>
    %323 = arith.negf %322 : vector<2x128xf32>
    %324 = math.exp %323 : vector<2x128xf32>
    %cst_96 = arith.constant 1.000000e+00 : f32
    %325 = vector.broadcast %cst_96 : f32 to vector<2x128xf32>
    %326 = arith.addf %325, %324 : vector<2x128xf32>
    %327 = arith.divf %325, %326 : vector<2x128xf32>
    %328 = math.tanh %322 : vector<2x128xf32>
    %329 = vector.extract_strided_slice %327 {offsets = [0, 0], sizes = [2, 32], strides = [1, 1]} : vector<2x128xf32> to vector<2x32xf32>
    %330 = vector.extract_strided_slice %327 {offsets = [0, 32], sizes = [2, 32], strides = [1, 1]} : vector<2x128xf32> to vector<2x32xf32>
    %331 = vector.extract_strided_slice %328 {offsets = [0, 64], sizes = [2, 32], strides = [1, 1]} : vector<2x128xf32> to vector<2x32xf32>
    %332 = vector.extract_strided_slice %327 {offsets = [0, 96], sizes = [2, 32], strides = [1, 1]} : vector<2x128xf32> to vector<2x32xf32>
    %333 = arith.mulf %330, %317 : vector<2x32xf32>
    %334 = arith.mulf %329, %331 : vector<2x32xf32>
    %335 = arith.addf %333, %334 : vector<2x32xf32>
    %336 = math.tanh %335 : vector<2x32xf32>
    %337 = arith.mulf %332, %336 : vector<2x32xf32>
    %cst_97 = arith.constant 0.000000e+00 : f32
    %338 = vector.broadcast %cst_97 : f32 to vector<2x32xf32>
    %339 = arith.maximumf %337, %338 : vector<2x32xf32>
    %c0_98 = arith.constant 0 : index
    %c0_99 = arith.constant 0 : index
    %340 = vector.load %arg7[%c0_98, %c0_99] : memref<32x10xf32, #tpu.memory_space<vmem>>, vector<32x10xf32>
    %cst_100 = arith.constant dense<0.000000e+00> : vector<2x10xf32>
    %341 = tpu.matmul %339, %340, %cst_100 {dimension_numbers = #tpu.dot_dimension_numbers<[1], [0], [0], [1], [0, 0, 1, 1], [], []>} : vector<2x32xf32>, vector<32x10xf32>, vector<2x10xf32> -> vector<2x10xf32>
    %c0_101 = arith.constant 0 : index
    %c0_102 = arith.constant 0 : index
    %342 = vector.load %arg8[%c0_101, %c0_102] : memref<1x10xf32, #tpu.memory_space<vmem>>, vector<1x10xf32>
    %343 = vector.broadcast %342 : vector<1x10xf32> to vector<2x10xf32>
    %344 = arith.addf %341, %343 : vector<2x10xf32>
    %c0_103 = arith.constant 0 : index
    %c0_104 = arith.constant 0 : index
    %345 = vector.load %arg9[%c0_103, %c0_104] : memref<2x10xf32, #tpu.memory_space<vmem>>, vector<2x10xf32>
    tpu.vector_store %arg9[%c0_103, %c0_104], %344 {strides = array<i32>} : memref<2x10xf32, #tpu.memory_space<vmem>>, vector<2x10xf32>,
    return
  }
}

</mosaic_0001>

<llo_original>
// kernel: rnn_forward.1
$region0: #{rnn_forward.1}
  #allocation0 [shape = 'u32[]', space=smem, size = 0x4, offset = 0x4, fixed_abs, tag = 'smem constant byte address 0x4 - core index']
  #allocation1 [shape = 'u32[144,128]{1,0:T(1,128)}', space=vmem, size = 0x12000, scoped, tag = 'internal scratch']
  #allocation2 [shape = 'f32[16,16]{1,0:T(8,128)}', space=vmem, size = 0x2000, scoped, tag = 'scratch operand']
  #allocation3 [shape = 'f32[16,32]{1,0:T(8,128)}', space=vmem, size = 0x2000, scoped, tag = 'scratch operand']
  %s0 = inlined_call_operand.hbm [shape: f32[2,8,16], index: 0, kind: input, shape index: {}]
  %s1 = inlined_call_operand.hbm [shape: f32[16,128], index: 1, kind: input, shape index: {}]
  %s2 = inlined_call_operand.vmem [shape: f32[32,128], index: 2, kind: input, shape index: {}]
  %s3 = inlined_call_operand.vmem [shape: f32[1,128], index: 3, kind: input, shape index: {}]
  %s4 = inlined_call_operand.vmem [shape: f32[32,128], index: 4, kind: input, shape index: {}]
  %s5 = inlined_call_operand.vmem [shape: f32[32,128], index: 5, kind: input, shape index: {}]
  %s6 = inlined_call_operand.vmem [shape: f32[1,128], index: 6, kind: input, shape index: {}]
  %s7 = inlined_call_operand.vmem [shape: f32[32,10], index: 7, kind: input, shape index: {}]
  %s8 = inlined_call_operand.vmem [shape: f32[1,10], index: 8, kind: input, shape index: {}]
  %s9 = inlined_call_operand.hbm [shape: f32[2,10], index: 9, kind: output, shape index: {}]
  %s10 = sld [smem:[#allocation0]]
  $region54: #{rnn_forward.1} parent=0
    _
  %s12 = ssub.s32 1, %s10
  %s13 = scalar_select 0, %s12, %s10
  $region1: #{rnn_forward.1} parent=0
    #allocation4 [shape = 'u8[8192]{0}', space=vmem, size = 0x2000, scoped, tag = 'input window, operand 0, single buffered']
    #allocation5 [shape = 's32[1]{0}', space=sflag, size = 0x4, scoped, tag = 'scoped memory for rnn_forward.1']
    #allocation6 [shape = 's32[1]{0}', space=sflag, size = 0x4, scoped, tag = 'scoped memory for rnn_forward.1']
    #allocation7 [shape = 'u8[8192]{0}', space=vmem, size = 0x2000, scoped, tag = 'input window, operand 1, single buffered']
    #allocation8 [shape = 's32[1]{0}', space=sflag, size = 0x4, scoped, tag = 'scoped memory for rnn_forward.1']
    #allocation9 [shape = 'u8[1024]{0}', space=vmem, size = 0x400, scoped, tag = 'output window, operand 0, single buffered']
    %14 = vsyncpa [#allocation5], 0
    %15 = vsyncpa [#allocation8], 0
    %16 = vsyncpa [#allocation6], 0
    // Predicated region
    $region2: #{rnn_forward.1} parent=1 // pred_check
      _
    $region3: #{rnn_forward.1} parent=1 // pred_check_branch
      %18 = sbr.rel (0) target = $region5
    $region4: #{rnn_forward.1} parent=1 // pred_region
      %s20 = ssub.s32 256, 256
      %21 = vsyncadd [#allocation5], %s20
      %s22 = sshll.u32 [#allocation4], 4
      %s23 = int_to_ptr.vmem [resolvable:$true] %s22
      %28 = dma.hbm_to_vmem [thread:$0]  %s0, 256, %s23, [#allocation5], 128, 128, 8
    $region5: #{rnn_forward.1} parent=1 // pred_fallthru
      _
    // Predicated region
    $region6: #{rnn_forward.1} parent=1 // pred_check
      _
    $region7: #{rnn_forward.1} parent=1 // pred_check_branch
      %30 = sbr.rel (0) target = $region9
    $region8: #{rnn_forward.1} parent=1 // pred_region
      %s32 = ssub.s32 256, 256
      %33 = vsyncadd [#allocation8], %s32
      %s34 = sshll.u32 [#allocation7], 4
      %s35 = int_to_ptr.vmem [resolvable:$true] %s34
      %40 = dma.hbm_to_vmem [thread:$0]  %s1, 256, %s35, [#allocation8], 128, 128, 8
    $region9: #{rnn_forward.1} parent=1 // pred_fallthru
      _
    // Predicated region
    $region10: #{rnn_forward.1} parent=1 // pred_check
      _
    $region11: #{rnn_forward.1} parent=1 // pred_check_branch
      %42 = sbr.rel (0) target = $region13
    $region12: #{rnn_forward.1} parent=1 // pred_region
      _
    $region13: #{rnn_forward.1} parent=1 // pred_fallthru
      _
    // Predicated region
    $region14: #{rnn_forward.1} parent=1 // pred_check
      _
    $region15: #{rnn_forward.1} parent=1 // pred_check_branch
      %44 = sbr.rel (0) target = $region17
    $region16: #{rnn_forward.1} parent=1 // pred_region
      _
    $region17: #{rnn_forward.1} parent=1 // pred_fallthru
      _
    // Predicated region
    $region18: #{rnn_forward.1} parent=1 // pred_check
      _
    $region19: #{rnn_forward.1} parent=1 // pred_check_branch
      %46 = sbr.rel (0) target = $region21
    $region20: #{rnn_forward.1} parent=1 // pred_region
      _
    $region21: #{rnn_forward.1} parent=1 // pred_fallthru
      _
    // Predicated region
    $region22: #{rnn_forward.1} parent=1 // pred_check
      _
    $region23: #{rnn_forward.1} parent=1 // pred_check_branch
      %48 = sbr.rel (0) target = $region25
    $region24: #{rnn_forward.1} parent=1 // pred_region
      _
    $region25: #{rnn_forward.1} parent=1 // pred_fallthru
      _
    // Predicated region
    $region26: #{rnn_forward.1} parent=1 // pred_check
      _
    $region27: #{rnn_forward.1} parent=1 // pred_check_branch
      %50 = sbr.rel (0) target = $region29
    $region28: #{rnn_forward.1} parent=1 // pred_region
      _
    $region29: #{rnn_forward.1} parent=1 // pred_fallthru
      _
    // Predicated region
    $region30: #{rnn_forward.1} parent=1 // pred_check
      _
    $region31: #{rnn_forward.1} parent=1 // pred_check_branch
      %52 = sbr.rel (0) target = $region33
    $region32: #{rnn_forward.1} parent=1 // pred_region
      _
    $region33: #{rnn_forward.1} parent=1 // pred_fallthru
      _
    // Predicated region
    $region34: #{rnn_forward.1} parent=1 // pred_check
      _
    $region35: #{rnn_forward.1} parent=1 // pred_check_branch
      %54 = sbr.rel (0) target = $region37
    $region36: #{rnn_forward.1} parent=1 // pred_region
      _
    $region37: #{rnn_forward.1} parent=1 // pred_fallthru
      _
    // Predicated region
    $region38: #{rnn_forward.1} parent=1 // pred_check
      _
    $region39: #{rnn_forward.1} parent=1 // pred_check_branch
      %56 = sbr.rel (0) target = $region41
    $region40: #{rnn_forward.1} parent=1 // pred_region
      %57 = dma.done [#allocation5], 256
    $region41: #{rnn_forward.1} parent=1 // pred_fallthru
      _
    // Predicated region
    $region42: #{rnn_forward.1} parent=1 // pred_check
      _
    $region43: #{rnn_forward.1} parent=1 // pred_check_branch
      %59 = sbr.rel (0) target = $region45
    $region44: #{rnn_forward.1} parent=1 // pred_region
      %60 = dma.done [#allocation8], 256
    $region45: #{rnn_forward.1} parent=1 // pred_fallthru
      _
    %v61 = vld [vmem:[#allocation4] sm:$0x1]
    %v62 = vld [vmem:[#allocation4 + $0x8] sm:$0x1]
    %v65 = vrot.slane %v62, 7
    %vm66 = vcmask 1041409
    %v67 = vsel %vm66, %v65, %v61
    %vm69 = vcmask 123904
    %70 = vst.msk [vmem:[#allocation2] sm:$0x3] %vm69, %v67
    %v71 = vld [vmem:[#allocation4 + $0x1] sm:$0x1]
    %v72 = vld [vmem:[#allocation4 + $0x9] sm:$0x1]
    %v75 = vrot.slane %v72, 7
    %v76 = vsel %vm66, %v75, %v71
    %78 = vst.msk [vmem:[#allocation2 + $0x2] sm:$0x3] %vm69, %v76
    %v79 = vld [vmem:[#allocation4 + $0x2] sm:$0x1]
    %v80 = vld [vmem:[#allocation4 + $0xa] sm:$0x1]
    %v83 = vrot.slane %v80, 7
    %v84 = vsel %vm66, %v83, %v79
    %86 = vst.msk [vmem:[#allocation2 + $0x4] sm:$0x3] %vm69, %v84
    %v87 = vld [vmem:[#allocation4 + $0x3] sm:$0x1]
    %v88 = vld [vmem:[#allocation4 + $0xb] sm:$0x1]
    %v91 = vrot.slane %v88, 7
    %v92 = vsel %vm66, %v91, %v87
    %94 = vst.msk [vmem:[#allocation2 + $0x6] sm:$0x3] %vm69, %v92
    %v95 = vld [vmem:[#allocation4 + $0x4] sm:$0x1]
    %v96 = vld [vmem:[#allocation4 + $0xc] sm:$0x1]
    %v99 = vrot.slane %v96, 7
    %v100 = vsel %vm66, %v99, %v95
    %102 = vst.msk [vmem:[#allocation2 + $0x8] sm:$0x3] %vm69, %v100
    %v103 = vld [vmem:[#allocation4 + $0x5] sm:$0x1]
    %v104 = vld [vmem:[#allocation4 + $0xd] sm:$0x1]
    %v107 = vrot.slane %v104, 7
    %v108 = vsel %vm66, %v107, %v103
    %110 = vst.msk [vmem:[#allocation2 + $0xa] sm:$0x3] %vm69, %v108
    %v111 = vld [vmem:[#allocation4 + $0x6] sm:$0x1]
    %v112 = vld [vmem:[#allocation4 + $0xe] sm:$0x1]
    %v115 = vrot.slane %v112, 7
    %v116 = vsel %vm66, %v115, %v111
    %118 = vst.msk [vmem:[#allocation2 + $0xc] sm:$0x3] %vm69, %v116
    %v119 = vld [vmem:[#allocation4 + $0x7] sm:$0x1]
    %v120 = vld [vmem:[#allocation4 + $0xf] sm:$0x1]
    %v123 = vrot.slane %v120, 7
    %v124 = vsel %vm66, %v123, %v119
    %126 = vst.msk [vmem:[#allocation2 + $0xe] sm:$0x3] %vm69, %v124
    %v127 = vld [vmem:[#allocation2] sm:$0xff]
    %v128 = vld [vmem:[#allocation2 + $0x8] sm:$0xff]
    %v129 = vld [vmem:[#allocation7] sm:$0xff]
    %v130 = vld [vmem:[#allocation7 + $0x8] sm:$0xff]
    %v131 = vld [vmem:[%s3] sm:$0x1]
    %v133 = vlaneseq
    %v134 = vshrl.u32 %v133, 7
    %v135 = vsub.s32 0, %v134
    %v136 = vrot.slane %v131, %v135
    %vm138 = vcmask 130048
    %v140 = vsel %vm138, %v127, 0
    %v143 = vsel %vm138, %v128, 0
    %145 = vmatprep.subr.mxu0 0.0
    %146 = vmatpush1.msra.mxu0 %v129
    %147 = vmatprep.subr.mxu0 0.0
    %148 = vmatpush1.msra.mxu0 %v130
    %149 = vmatprep.subr.mxu0 0.0
    %150 = vmatpush1.msra.mxu0 0.0
    %151 = vmatprep.subr.mxu0 0.0
    %152 = vmatpush1.msra.mxu0 0.0
    %153 = vmatprep.subr.mxu0 0.0
    %154 = vmatpush1.msra.mxu0 0.0
    %155 = vmatprep.subr.mxu0 0.0
    %156 = vmatpush1.msra.mxu0 0.0
    %157 = vmatprep.subr.mxu0 0.0
    %158 = vmatpush1.msra.mxu0 0.0
    %159 = vmatprep.subr.mxu0 0.0
    %160 = vmatpush1.msra.mxu0 0.0
    %161 = vmatprep.subr.mxu0 0.0
    %162 = vmatpush1.msra.mxu0 0.0
    %163 = vmatprep.subr.mxu0 0.0
    %164 = vmatpush1.msra.mxu0 0.0
    %165 = vmatprep.subr.mxu0 0.0
    %166 = vmatpush1.msra.mxu0 0.0
    %167 = vmatprep.subr.mxu0 0.0
    %168 = vmatpush1.msra.mxu0 0.0
    %169 = vmatprep.subr.mxu0 0.0
    %170 = vmatpush1.msra.mxu0 0.0
    %171 = vmatprep.subr.mxu0 0.0
    %172 = vmatpush1.msra.mxu0 0.0
    %173 = vmatprep.subr.mxu0 0.0
    %174 = vmatpush1.msra.mxu0 0.0
    %175 = vmatprep.subr.mxu0 0.0
    %176 = vmatpush1.msra.mxu0 0.0
    %177 = vmatprep.subr.mxu0 0.0
    %178 = vmatpush1.msra.mxu0 0.0
    %179 = vmatprep.subr.mxu0 0.0
    %180 = vmatpush1.msra.mxu0 0.0
    %181 = vmatprep.subr.mxu0 0.0
    %182 = vmatpush1.msra.mxu0 0.0
    %183 = vmatprep.subr.mxu0 0.0
    %184 = vmatpush1.msra.mxu0 0.0
    %185 = vmatprep.subr.mxu0 0.0
    %186 = vmatpush1.msra.mxu0 0.0
    %187 = vmatprep.subr.mxu0 0.0
    %188 = vmatpush1.msra.mxu0 0.0
    %189 = vmatprep.subr.mxu0 0.0
    %190 = vmatpush1.msra.mxu0 0.0
    %191 = vmatprep.subr.mxu0 0.0
    %192 = vmatpush1.msra.mxu0 0.0
    %193 = vmatprep.subr.mxu0 0.0
    %194 = vmatpush1.msra.mxu0 0.0
    %195 = vmatprep.subr.mxu0 0.0
    %196 = vmatpush1.msra.mxu0 0.0
    %197 = vmatprep.subr.mxu0 0.0
    %198 = vmatpush1.msra.mxu0 0.0
    %199 = vmatprep.subr.mxu0 0.0
    %200 = vmatpush1.msra.mxu0 0.0
    %201 = vmatprep.subr.mxu0 0.0
    %202 = vmatpush1.msra.mxu0 0.0
    %203 = vmatprep.subr.mxu0 0.0
    %204 = vmatpush1.msra.mxu0 0.0
    %205 = vmatprep.subr.mxu0 0.0
    %206 = vmatpush1.msra.mxu0 0.0
    %207 = vmatprep.subr.mxu0 0.0
    %208 = vmatpush1.msra.mxu0 0.0
    %209 = vmatprep.mubr.f32.mxu0 0.0
    %210 = vmatmul.mubr.f32.gmra.mrb[0].mxu0 %v140
    %v211 = vpop.f32.mrb[0].mxu0
    %v212 = vadd.f32 %v136, %v211
    %v213 = vpop.f32.mrb[0].mxu0
    %214 = vmatprep.mubr.f32.mxu0 0.0
    %215 = vmatmul.mubr.f32.gmra.mrb[0].mxu0 %v143
    %v216 = vpop.f32.mrb[0].mxu0
    %v217 = vadd.f32 %v136, %v216
    %v218 = vpop.f32.mrb[0].mxu0
    %219 = vdwg.mxu0
    %v220 = vld [vmem:[%s2] sm:$0xff]
    %v221 = vld [vmem:[%s2 + $0x8] sm:$0xff]
    %v222 = vld [vmem:[%s2 + $0x10] sm:$0xff]
    %v223 = vld [vmem:[%s2 + $0x18] sm:$0xff]
    %vm224 = vcmask 261120
    %v226 = vsel %vm224, 0.0, 0
    %228 = vmatprep.subr.mxu0 0.0
    %229 = vmatpush1.msra.mxu0 %v220
    %230 = vmatprep.subr.mxu0 0.0
    %231 = vmatpush1.msra.mxu0 %v221
    %232 = vmatprep.subr.mxu0 0.0
    %233 = vmatpush1.msra.mxu0 %v222
    %234 = vmatprep.subr.mxu0 0.0
    %235 = vmatpush1.msra.mxu0 %v223
    %236 = vmatprep.subr.mxu0 0.0
    %237 = vmatpush1.msra.mxu0 0.0
    %238 = vmatprep.subr.mxu0 0.0
    %239 = vmatpush1.msra.mxu0 0.0
    %240 = vmatprep.subr.mxu0 0.0
    %241 = vmatpush1.msra.mxu0 0.0
    %242 = vmatprep.subr.mxu0 0.0
    %243 = vmatpush1.msra.mxu0 0.0
    %244 = vmatprep.subr.mxu0 0.0
    %245 = vmatpush1.msra.mxu0 0.0
    %246 = vmatprep.subr.mxu0 0.0
    %247 = vmatpush1.msra.mxu0 0.0
    %248 = vmatprep.subr.mxu0 0.0
    %249 = vmatpush1.msra.mxu0 0.0
    %250 = vmatprep.subr.mxu0 0.0
    %251 = vmatpush1.msra.mxu0 0.0
    %252 = vmatprep.subr.mxu0 0.0
    %253 = vmatpush1.msra.mxu0 0.0
    %254 = vmatprep.subr.mxu0 0.0
    %255 = vmatpush1.msra.mxu0 0.0
    %256 = vmatprep.subr.mxu0 0.0
    %257 = vmatpush1.msra.mxu0 0.0
    %258 = vmatprep.subr.mxu0 0.0
    %259 = vmatpush1.msra.mxu0 0.0
    %260 = vmatprep.subr.mxu0 0.0
    %261 = vmatpush1.msra.mxu0 0.0
    %262 = vmatprep.subr.mxu0 0.0
    %263 = vmatpush1.msra.mxu0 0.0
    %264 = vmatprep.subr.mxu0 0.0
    %265 = vmatpush1.msra.mxu0 0.0
    %266 = vmatprep.subr.mxu0 0.0
    %267 = vmatpush1.msra.mxu0 0.0
    %268 = vmatprep.subr.mxu0 0.0
    %269 = vmatpush1.msra.mxu0 0.0
    %270 = vmatprep.subr.mxu0 0.0
    %271 = vmatpush1.msra.mxu0 0.0
    %272 = vmatprep.subr.mxu0 0.0
    %273 = vmatpush1.msra.mxu0 0.0
    %274 = vmatprep.subr.mxu0 0.0
    %275 = vmatpush1.msra.mxu0 0.0
    %276 = vmatprep.subr.mxu0 0.0
    %277 = vmatpush1.msra.mxu0 0.0
    %278 = vmatprep.subr.mxu0 0.0
    %279 = vmatpush1.msra.mxu0 0.0
    %280 = vmatprep.subr.mxu0 0.0
    %281 = vmatpush1.msra.mxu0 0.0
    %282 = vmatprep.subr.mxu0 0.0
    %283 = vmatpush1.msra.mxu0 0.0
    %284 = vmatprep.subr.mxu0 0.0
    %285 = vmatpush1.msra.mxu0 0.0
    %286 = vmatprep.subr.mxu0 0.0
    %287 = vmatpush1.msra.mxu0 0.0
    %288 = vmatprep.subr.mxu0 0.0
    %289 = vmatpush1.msra.mxu0 0.0
    %290 = vmatprep.subr.mxu0 0.0
    %291 = vmatpush1.msra.mxu0 0.0
    %292 = vmatprep.mubr.f32.mxu0 0.0
    %293 = vmatmul.mubr.f32.gmra.mrb[0].mxu0 %v226
    %v294 = vpop.f32.mrb[0].mxu0
    %v295 = vadd.f32 0.0, %v294
    %v296 = vpop.f32.mrb[0].mxu0
    %297 = vdwg.mxu0
    %v298 = vadd.f32 %v212, %v295
    %v299 = vxor.u32 %v298, 2147483648
    %v300 = vmul.f32 %v299, 1.442695
    %v301 = vpow.pop %v300
    %v302 = vadd.f32 %v301, 1.0
    %v303 = vrcp.pop %v302
    %v304 = vmul.f32 1.0, %v303
    %v305 = vtanh.pop %v298
    %v306 = vmul.f32 %v304, 0.0
    %308 = vrot.lane.b32.xlu0 %v305, 64
    %v309 = vpop.permute.xlu0 %308
    %v311 = vmul.f32 %v304, %v309
    %313 = vrot.lane.b32.xlu0 %v311, 32
    %v314 = vpop.permute.xlu0 %313
    %v316 = vadd.f32 %v306, %v314
    %v317 = vtanh.pop %v316
    %319 = vrot.lane.b32.xlu0 %v317, 64
    %v320 = vpop.permute.xlu0 %319
    %v322 = vmul.f32 %v304, %v320
    %324 = vrot.lane.b32.xlu0 %v322, 32
    %v325 = vpop.permute.xlu0 %324
    %vm327 = vcmask 254976
    %328 = vst.msk [vmem:[#allocation3] sm:$0x3] %vm327, %v325
    %v329 = vsel %vm224, %v325, 0
    %331 = vmatprep.subr.mxu0 0.0
    %332 = vmatpush1.msra.mxu0 %v220
    %333 = vmatprep.subr.mxu0 0.0
    %334 = vmatpush1.msra.mxu0 %v221
    %335 = vmatprep.subr.mxu0 0.0
    %336 = vmatpush1.msra.mxu0 %v222
    %337 = vmatprep.subr.mxu0 0.0
    %338 = vmatpush1.msra.mxu0 %v223
    %339 = vmatprep.subr.mxu0 0.0
    %340 = vmatpush1.msra.mxu0 0.0
    %341 = vmatprep.subr.mxu0 0.0
    %342 = vmatpush1.msra.mxu0 0.0
    %343 = vmatprep.subr.mxu0 0.0
    %344 = vmatpush1.msra.mxu0 0.0
    %345 = vmatprep.subr.mxu0 0.0
    %346 = vmatpush1.msra.mxu0 0.0
    %347 = vmatprep.subr.mxu0 0.0
    %348 = vmatpush1.msra.mxu0 0.0
    %349 = vmatprep.subr.mxu0 0.0
    %350 = vmatpush1.msra.mxu0 0.0
    %351 = vmatprep.subr.mxu0 0.0
    %352 = vmatpush1.msra.mxu0 0.0
    %353 = vmatprep.subr.mxu0 0.0
    %354 = vmatpush1.msra.mxu0 0.0
    %355 = vmatprep.subr.mxu0 0.0
    %356 = vmatpush1.msra.mxu0 0.0
    %357 = vmatprep.subr.mxu0 0.0
    %358 = vmatpush1.msra.mxu0 0.0
    %359 = vmatprep.subr.mxu0 0.0
    %360 = vmatpush1.msra.mxu0 0.0
    %361 = vmatprep.subr.mxu0 0.0
    %362 = vmatpush1.msra.mxu0 0.0
    %363 = vmatprep.subr.mxu0 0.0
    %364 = vmatpush1.msra.mxu0 0.0
    %365 = vmatprep.subr.mxu0 0.0
    %366 = vmatpush1.msra.mxu0 0.0
    %367 = vmatprep.subr.mxu0 0.0
    %368 = vmatpush1.msra.mxu0 0.0
    %369 = vmatprep.subr.mxu0 0.0
    %370 = vmatpush1.msra.mxu0 0.0
    %371 = vmatprep.subr.mxu0 0.0
    %372 = vmatpush1.msra.mxu0 0.0
    %373 = vmatprep.subr.mxu0 0.0
    %374 = vmatpush1.msra.mxu0 0.0
    %375 = vmatprep.subr.mxu0 0.0
    %376 = vmatpush1.msra.mxu0 0.0
    %377 = vmatprep.subr.mxu0 0.0
    %378 = vmatpush1.msra.mxu0 0.0
    %379 = vmatprep.subr.mxu0 0.0
    %380 = vmatpush1.msra.mxu0 0.0
    %381 = vmatprep.subr.mxu0 0.0
    %382 = vmatpush1.msra.mxu0 0.0
    %383 = vmatprep.subr.mxu0 0.0
    %384 = vmatpush1.msra.mxu0 0.0
    %385 = vmatprep.subr.mxu0 0.0
    %386 = vmatpush1.msra.mxu0 0.0
    %387 = vmatprep.subr.mxu0 0.0
    %388 = vmatpush1.msra.mxu0 0.0
    %389 = vmatprep.subr.mxu0 0.0
    %390 = vmatpush1.msra.mxu0 0.0
    %391 = vmatprep.subr.mxu0 0.0
    %392 = vmatpush1.msra.mxu0 0.0
    %393 = vmatprep.subr.mxu0 0.0
    %394 = vmatpush1.msra.mxu0 0.0
    %395 = vmatprep.mubr.f32.mxu0 0.0
    %396 = vmatmul.mubr.f32.gmra.mrb[0].mxu0 %v329
    %v397 = vpop.f32.mrb[0].mxu0
    %v398 = vadd.f32 0.0, %v397
    %v399 = vpop.f32.mrb[0].mxu0
    %400 = vdwg.mxu0
    %v402 = vrot.slane %v398, 6
    %v404 = vadd.f32 %v212, %v402
    %v405 = vxor.u32 %v404, 2147483648
    %v406 = vmul.f32 %v405, 1.442695
    %v407 = vpow.pop %v406
    %v408 = vadd.f32 %v407, 1.0
    %v409 = vrcp.pop %v408
    %v410 = vmul.f32 1.0, %v409
    %v411 = vtanh.pop %v404
    %v413 = vrot.slane %v316, 6
    %v415 = vmul.f32 %v410, %v413
    %417 = vrot.lane.b32.xlu0 %v411, 64
    %v418 = vpop.permute.xlu0 %417
    %v420 = vmul.f32 %v410, %v418
    %422 = vrot.lane.b32.xlu0 %v420, 32
    %v423 = vpop.permute.xlu0 %422
    %v425 = vadd.f32 %v415, %v423
    %v426 = vtanh.pop %v425
    %428 = vrot.lane.b32.xlu0 %v426, 64
    %v429 = vpop.permute.xlu0 %428
    %v431 = vmul.f32 %v410, %v429
    %433 = vrot.lane.b32.xlu0 %v431, 32
    %v434 = vpop.permute.xlu0 %433
    %vm436 = vcmask 257026
    %437 = vst.msk [vmem:[#allocation3] sm:$0xc] %vm436, %v434
    %v438 = vrot.slane %v431, 2
    %439 = vrot.lane.b32.xlu0 %v438, 32
    %v440 = vpop.permute.xlu0 %439
    %v441 = vsel %vm224, %v440, 0
    %443 = vmatprep.subr.mxu0 0.0
    %444 = vmatpush1.msra.mxu0 %v220
    %445 = vmatprep.subr.mxu0 0.0
    %446 = vmatpush1.msra.mxu0 %v221
    %447 = vmatprep.subr.mxu0 0.0
    %448 = vmatpush1.msra.mxu0 %v222
    %449 = vmatprep.subr.mxu0 0.0
    %450 = vmatpush1.msra.mxu0 %v223
    %451 = vmatprep.subr.mxu0 0.0
    %452 = vmatpush1.msra.mxu0 0.0
    %453 = vmatprep.subr.mxu0 0.0
    %454 = vmatpush1.msra.mxu0 0.0
    %455 = vmatprep.subr.mxu0 0.0
    %456 = vmatpush1.msra.mxu0 0.0
    %457 = vmatprep.subr.mxu0 0.0
    %458 = vmatpush1.msra.mxu0 0.0
    %459 = vmatprep.subr.mxu0 0.0
    %460 = vmatpush1.msra.mxu0 0.0
    %461 = vmatprep.subr.mxu0 0.0
    %462 = vmatpush1.msra.mxu0 0.0
    %463 = vmatprep.subr.mxu0 0.0
    %464 = vmatpush1.msra.mxu0 0.0
    %465 = vmatprep.subr.mxu0 0.0
    %466 = vmatpush1.msra.mxu0 0.0
    %467 = vmatprep.subr.mxu0 0.0
    %468 = vmatpush1.msra.mxu0 0.0
    %469 = vmatprep.subr.mxu0 0.0
    %470 = vmatpush1.msra.mxu0 0.0
    %471 = vmatprep.subr.mxu0 0.0
    %472 = vmatpush1.msra.mxu0 0.0
    %473 = vmatprep.subr.mxu0 0.0
    %474 = vmatpush1.msra.mxu0 0.0
    %475 = vmatprep.subr.mxu0 0.0
    %476 = vmatpush1.msra.mxu0 0.0
    %477 = vmatprep.subr.mxu0 0.0
    %478 = vmatpush1.msra.mxu0 0.0
    %479 = vmatprep.subr.mxu0 0.0
    %480 = vmatpush1.msra.mxu0 0.0
    %481 = vmatprep.subr.mxu0 0.0
    %482 = vmatpush1.msra.mxu0 0.0
    %483 = vmatprep.subr.mxu0 0.0
    %484 = vmatpush1.msra.mxu0 0.0
    %485 = vmatprep.subr.mxu0 0.0
    %486 = vmatpush1.msra.mxu0 0.0
    %487 = vmatprep.subr.mxu0 0.0
    %488 = vmatpush1.msra.mxu0 0.0
    %489 = vmatprep.subr.mxu0 0.0
    %490 = vmatpush1.msra.mxu0 0.0
    %491 = vmatprep.subr.mxu0 0.0
    %492 = vmatpush1.msra.mxu0 0.0
    %493 = vmatprep.subr.mxu0 0.0
    %494 = vmatpush1.msra.mxu0 0.0
    %495 = vmatprep.subr.mxu0 0.0
    %496 = vmatpush1.msra.mxu0 0.0
    %497 = vmatprep.subr.mxu0 0.0
    %498 = vmatpush1.msra.mxu0 0.0
    %499 = vmatprep.subr.mxu0 0.0
    %500 = vmatpush1.msra.mxu0 0.0
    %501 = vmatprep.subr.mxu0 0.0
    %502 = vmatpush1.msra.mxu0 0.0
    %503 = vmatprep.subr.mxu0 0.0
    %504 = vmatpush1.msra.mxu0 0.0
    %505 = vmatprep.subr.mxu0 0.0
    %506 = vmatpush1.msra.mxu0 0.0
    %507 = vmatprep.mubr.f32.mxu0 0.0
    %508 = vmatmul.mubr.f32.gmra.mrb[0].mxu0 %v441
    %v509 = vpop.f32.mrb[0].mxu0
    %v510 = vadd.f32 0.0, %v509
    %v511 = vpop.f32.mrb[0].mxu0
    %512 = vdwg.mxu0
    %v514 = vrot.slane %v510, 4
    %v516 = vadd.f32 %v212, %v514
    %v517 = vxor.u32 %v516, 2147483648
    %v518 = vmul.f32 %v517, 1.442695
    %v519 = vpow.pop %v518
    %v520 = vadd.f32 %v519, 1.0
    %v521 = vrcp.pop %v520
    %v522 = vmul.f32 1.0, %v521
    %v523 = vtanh.pop %v516
    %v525 = vrot.slane %v425, 6
    %v527 = vmul.f32 %v522, %v525
    %529 = vrot.lane.b32.xlu0 %v523, 64
    %v530 = vpop.permute.xlu0 %529
    %v532 = vmul.f32 %v522, %v530
    %534 = vrot.lane.b32.xlu0 %v532, 32
    %v535 = vpop.permute.xlu0 %534
    %v537 = vadd.f32 %v527, %v535
    %v538 = vtanh.pop %v537
    %540 = vrot.lane.b32.xlu0 %v538, 64
    %v541 = vpop.permute.xlu0 %540
    %v543 = vmul.f32 %v522, %v541
    %545 = vrot.lane.b32.xlu0 %v543, 32
    %v546 = vpop.permute.xlu0 %545
    %vm548 = vcmask 259076
    %549 = vst.msk [vmem:[#allocation3] sm:$0x30] %vm548, %v546
    %v550 = vrot.slane %v543, 4
    %551 = vrot.lane.b32.xlu0 %v550, 32
    %v552 = vpop.permute.xlu0 %551
    %v553 = vsel %vm224, %v552, 0
    %555 = vmatprep.subr.mxu0 0.0
    %556 = vmatpush1.msra.mxu0 %v220
    %557 = vmatprep.subr.mxu0 0.0
    %558 = vmatpush1.msra.mxu0 %v221
    %559 = vmatprep.subr.mxu0 0.0
    %560 = vmatpush1.msra.mxu0 %v222
    %561 = vmatprep.subr.mxu0 0.0
    %562 = vmatpush1.msra.mxu0 %v223
    %563 = vmatprep.subr.mxu0 0.0
    %564 = vmatpush1.msra.mxu0 0.0
    %565 = vmatprep.subr.mxu0 0.0
    %566 = vmatpush1.msra.mxu0 0.0
    %567 = vmatprep.subr.mxu0 0.0
    %568 = vmatpush1.msra.mxu0 0.0
    %569 = vmatprep.subr.mxu0 0.0
    %570 = vmatpush1.msra.mxu0 0.0
    %571 = vmatprep.subr.mxu0 0.0
    %572 = vmatpush1.msra.mxu0 0.0
    %573 = vmatprep.subr.mxu0 0.0
    %574 = vmatpush1.msra.mxu0 0.0
    %575 = vmatprep.subr.mxu0 0.0
    %576 = vmatpush1.msra.mxu0 0.0
    %577 = vmatprep.subr.mxu0 0.0
    %578 = vmatpush1.msra.mxu0 0.0
    %579 = vmatprep.subr.mxu0 0.0
    %580 = vmatpush1.msra.mxu0 0.0
    %581 = vmatprep.subr.mxu0 0.0
    %582 = vmatpush1.msra.mxu0 0.0
    %583 = vmatprep.subr.mxu0 0.0
    %584 = vmatpush1.msra.mxu0 0.0
    %585 = vmatprep.subr.mxu0 0.0
    %586 = vmatpush1.msra.mxu0 0.0
    %587 = vmatprep.subr.mxu0 0.0
    %588 = vmatpush1.msra.mxu0 0.0
    %589 = vmatprep.subr.mxu0 0.0
    %590 = vmatpush1.msra.mxu0 0.0
    %591 = vmatprep.subr.mxu0 0.0
    %592 = vmatpush1.msra.mxu0 0.0
    %593 = vmatprep.subr.mxu0 0.0
    %594 = vmatpush1.msra.mxu0 0.0
    %595 = vmatprep.subr.mxu0 0.0
    %596 = vmatpush1.msra.mxu0 0.0
    %597 = vmatprep.subr.mxu0 0.0
    %598 = vmatpush1.msra.mxu0 0.0
    %599 = vmatprep.subr.mxu0 0.0
    %600 = vmatpush1.msra.mxu0 0.0
    %601 = vmatprep.subr.mxu0 0.0
    %602 = vmatpush1.msra.mxu0 0.0
    %603 = vmatprep.subr.mxu0 0.0
    %604 = vmatpush1.msra.mxu0 0.0
    %605 = vmatprep.subr.mxu0 0.0
    %606 = vmatpush1.msra.mxu0 0.0
    %607 = vmatprep.subr.mxu0 0.0
    %608 = vmatpush1.msra.mxu0 0.0
    %609 = vmatprep.subr.mxu0 0.0
    %610 = vmatpush1.msra.mxu0 0.0
    %611 = vmatprep.subr.mxu0 0.0
    %612 = vmatpush1.msra.mxu0 0.0
    %613 = vmatprep.subr.mxu0 0.0
    %614 = vmatpush1.msra.mxu0 0.0
    %615 = vmatprep.subr.mxu0 0.0
    %616 = vmatpush1.msra.mxu0 0.0
    %617 = vmatprep.subr.mxu0 0.0
    %618 = vmatpush1.msra.mxu0 0.0
    %619 = vmatprep.mubr.f32.mxu0 0.0
    %620 = vmatmul.mubr.f32.gmra.mrb[0].mxu0 %v553
    %v621 = vpop.f32.mrb[0].mxu0
    %v622 = vadd.f32 0.0, %v621
    %v623 = vpop.f32.mrb[0].mxu0
    %624 = vdwg.mxu0
    %v626 = vrot.slane %v622, 2
    %v628 = vadd.f32 %v212, %v626
    %v629 = vxor.u32 %v628, 2147483648
    %v630 = vmul.f32 %v629, 1.442695
    %v631 = vpow.pop %v630
    %v632 = vadd.f32 %v631, 1.0
    %v633 = vrcp.pop %v632
    %v634 = vmul.f32 1.0, %v633
    %v635 = vtanh.pop %v628
    %v637 = vrot.slane %v537, 6
    %v639 = vmul.f32 %v634, %v637
    %641 = vrot.lane.b32.xlu0 %v635, 64
    %v642 = vpop.permute.xlu0 %641
    %v644 = vmul.f32 %v634, %v642
    %646 = vrot.lane.b32.xlu0 %v644, 32
    %v647 = vpop.permute.xlu0 %646
    %v649 = vadd.f32 %v639, %v647
    %v650 = vtanh.pop %v649
    %652 = vrot.lane.b32.xlu0 %v650, 64
    %v653 = vpop.permute.xlu0 %652
    %v655 = vmul.f32 %v634, %v653
    %657 = vrot.lane.b32.xlu0 %v655, 32
    %v658 = vpop.permute.xlu0 %657
    %vm660 = vcmask 261126
    %661 = vst.msk [vmem:[#allocation3] sm:$0xc0] %vm660, %v658
    %v662 = vrot.slane %v655, 6
    %663 = vrot.lane.b32.xlu0 %v662, 32
    %v664 = vpop.permute.xlu0 %663
    %v665 = vsel %vm224, %v664, 0
    %667 = vmatprep.subr.mxu0 0.0
    %668 = vmatpush1.msra.mxu0 %v220
    %669 = vmatprep.subr.mxu0 0.0
    %670 = vmatpush1.msra.mxu0 %v221
    %671 = vmatprep.subr.mxu0 0.0
    %672 = vmatpush1.msra.mxu0 %v222
    %673 = vmatprep.subr.mxu0 0.0
    %674 = vmatpush1.msra.mxu0 %v223
    %675 = vmatprep.subr.mxu0 0.0
    %676 = vmatpush1.msra.mxu0 0.0
    %677 = vmatprep.subr.mxu0 0.0
    %678 = vmatpush1.msra.mxu0 0.0
    %679 = vmatprep.subr.mxu0 0.0
    %680 = vmatpush1.msra.mxu0 0.0
    %681 = vmatprep.subr.mxu0 0.0
    %682 = vmatpush1.msra.mxu0 0.0
    %683 = vmatprep.subr.mxu0 0.0
    %684 = vmatpush1.msra.mxu0 0.0
    %685 = vmatprep.subr.mxu0 0.0
    %686 = vmatpush1.msra.mxu0 0.0
    %687 = vmatprep.subr.mxu0 0.0
    %688 = vmatpush1.msra.mxu0 0.0
    %689 = vmatprep.subr.mxu0 0.0
    %690 = vmatpush1.msra.mxu0 0.0
    %691 = vmatprep.subr.mxu0 0.0
    %692 = vmatpush1.msra.mxu0 0.0
    %693 = vmatprep.subr.mxu0 0.0
    %694 = vmatpush1.msra.mxu0 0.0
    %695 = vmatprep.subr.mxu0 0.0
    %696 = vmatpush1.msra.mxu0 0.0
    %697 = vmatprep.subr.mxu0 0.0
    %698 = vmatpush1.msra.mxu0 0.0
    %699 = vmatprep.subr.mxu0 0.0
    %700 = vmatpush1.msra.mxu0 0.0
    %701 = vmatprep.subr.mxu0 0.0
    %702 = vmatpush1.msra.mxu0 0.0
    %703 = vmatprep.subr.mxu0 0.0
    %704 = vmatpush1.msra.mxu0 0.0
    %705 = vmatprep.subr.mxu0 0.0
    %706 = vmatpush1.msra.mxu0 0.0
    %707 = vmatprep.subr.mxu0 0.0
    %708 = vmatpush1.msra.mxu0 0.0
    %709 = vmatprep.subr.mxu0 0.0
    %710 = vmatpush1.msra.mxu0 0.0
    %711 = vmatprep.subr.mxu0 0.0
    %712 = vmatpush1.msra.mxu0 0.0
    %713 = vmatprep.subr.mxu0 0.0
    %714 = vmatpush1.msra.mxu0 0.0
    %715 = vmatprep.subr.mxu0 0.0
    %716 = vmatpush1.msra.mxu0 0.0
    %717 = vmatprep.subr.mxu0 0.0
    %718 = vmatpush1.msra.mxu0 0.0
    %719 = vmatprep.subr.mxu0 0.0
    %720 = vmatpush1.msra.mxu0 0.0
    %721 = vmatprep.subr.mxu0 0.0
    %722 = vmatpush1.msra.mxu0 0.0
    %723 = vmatprep.subr.mxu0 0.0
    %724 = vmatpush1.msra.mxu0 0.0
    %725 = vmatprep.subr.mxu0 0.0
    %726 = vmatpush1.msra.mxu0 0.0
    %727 = vmatprep.subr.mxu0 0.0
    %728 = vmatpush1.msra.mxu0 0.0
    %729 = vmatprep.subr.mxu0 0.0
    %730 = vmatpush1.msra.mxu0 0.0
    %731 = vmatprep.mubr.f32.mxu0 0.0
    %732 = vmatmul.mubr.f32.gmra.mrb[0].mxu0 %v665
    %v733 = vpop.f32.mrb[0].mxu0
    %v734 = vadd.f32 0.0, %v733
    %v735 = vpop.f32.mrb[0].mxu0
    %736 = vdwg.mxu0
    %v737 = vadd.f32 %v217, %v734
    %v738 = vxor.u32 %v737, 2147483648
    %v739 = vmul.f32 %v738, 1.442695
    %v740 = vpow.pop %v739
    %v741 = vadd.f32 %v740, 1.0
    %v742 = vrcp.pop %v741
    %v743 = vmul.f32 1.0, %v742
    %v744 = vtanh.pop %v737
    %v746 = vrot.slane %v649, 6
    %v748 = vmul.f32 %v743, %v746
    %750 = vrot.lane.b32.xlu0 %v744, 64
    %v751 = vpop.permute.xlu0 %750
    %v753 = vmul.f32 %v743, %v751
    %755 = vrot.lane.b32.xlu0 %v753, 32
    %v756 = vpop.permute.xlu0 %755
    %v758 = vadd.f32 %v748, %v756
    %v759 = vtanh.pop %v758
    %761 = vrot.lane.b32.xlu0 %v759, 64
    %v762 = vpop.permute.xlu0 %761
    %v764 = vmul.f32 %v743, %v762
    %766 = vrot.lane.b32.xlu0 %v764, 32
    %v767 = vpop.permute.xlu0 %766
    %769 = vst.msk [vmem:[#allocation3 + $0x8] sm:$0x3] %vm327, %v767
    %v770 = vsel %vm224, %v767, 0
    %772 = vmatprep.subr.mxu0 0.0
    %773 = vmatpush1.msra.mxu0 %v220
    %774 = vmatprep.subr.mxu0 0.0
    %775 = vmatpush1.msra.mxu0 %v221
    %776 = vmatprep.subr.mxu0 0.0
    %777 = vmatpush1.msra.mxu0 %v222
    %778 = vmatprep.subr.mxu0 0.0
    %779 = vmatpush1.msra.mxu0 %v223
    %780 = vmatprep.subr.mxu0 0.0
    %781 = vmatpush1.msra.mxu0 0.0
    %782 = vmatprep.subr.mxu0 0.0
    %783 = vmatpush1.msra.mxu0 0.0
    %784 = vmatprep.subr.mxu0 0.0
    %785 = vmatpush1.msra.mxu0 0.0
    %786 = vmatprep.subr.mxu0 0.0
    %787 = vmatpush1.msra.mxu0 0.0
    %788 = vmatprep.subr.mxu0 0.0
    %789 = vmatpush1.msra.mxu0 0.0
    %790 = vmatprep.subr.mxu0 0.0
    %791 = vmatpush1.msra.mxu0 0.0
    %792 = vmatprep.subr.mxu0 0.0
    %793 = vmatpush1.msra.mxu0 0.0
    %794 = vmatprep.subr.mxu0 0.0
    %795 = vmatpush1.msra.mxu0 0.0
    %796 = vmatprep.subr.mxu0 0.0
    %797 = vmatpush1.msra.mxu0 0.0
    %798 = vmatprep.subr.mxu0 0.0
    %799 = vmatpush1.msra.mxu0 0.0
    %800 = vmatprep.subr.mxu0 0.0
    %801 = vmatpush1.msra.mxu0 0.0
    %802 = vmatprep.subr.mxu0 0.0
    %803 = vmatpush1.msra.mxu0 0.0
    %804 = vmatprep.subr.mxu0 0.0
    %805 = vmatpush1.msra.mxu0 0.0
    %806 = vmatprep.subr.mxu0 0.0
    %807 = vmatpush1.msra.mxu0 0.0
    %808 = vmatprep.subr.mxu0 0.0
    %809 = vmatpush1.msra.mxu0 0.0
    %810 = vmatprep.subr.mxu0 0.0
    %811 = vmatpush1.msra.mxu0 0.0
    %812 = vmatprep.subr.mxu0 0.0
    %813 = vmatpush1.msra.mxu0 0.0
    %814 = vmatprep.subr.mxu0 0.0
    %815 = vmatpush1.msra.mxu0 0.0
    %816 = vmatprep.subr.mxu0 0.0
    %817 = vmatpush1.msra.mxu0 0.0
    %818 = vmatprep.subr.mxu0 0.0
    %819 = vmatpush1.msra.mxu0 0.0
    %820 = vmatprep.subr.mxu0 0.0
    %821 = vmatpush1.msra.mxu0 0.0
    %822 = vmatprep.subr.mxu0 0.0
    %823 = vmatpush1.msra.mxu0 0.0
    %824 = vmatprep.subr.mxu0 0.0
    %825 = vmatpush1.msra.mxu0 0.0
    %826 = vmatprep.subr.mxu0 0.0
    %827 = vmatpush1.msra.mxu0 0.0
    %828 = vmatprep.subr.mxu0 0.0
    %829 = vmatpush1.msra.mxu0 0.0
    %830 = vmatprep.subr.mxu0 0.0
    %831 = vmatpush1.msra.mxu0 0.0
    %832 = vmatprep.subr.mxu0 0.0
    %833 = vmatpush1.msra.mxu0 0.0
    %834 = vmatprep.subr.mxu0 0.0
    %835 = vmatpush1.msra.mxu0 0.0
    %836 = vmatprep.mubr.f32.mxu0 0.0
    %837 = vmatmul.mubr.f32.gmra.mrb[0].mxu0 %v770
    %v838 = vpop.f32.mrb[0].mxu0
    %v839 = vadd.f32 0.0, %v838
    %v840 = vpop.f32.mrb[0].mxu0
    %841 = vdwg.mxu0
    %v843 = vrot.slane %v839, 6
    %v845 = vadd.f32 %v217, %v843
    %v846 = vxor.u32 %v845, 2147483648
    %v847 = vmul.f32 %v846, 1.442695
    %v848 = vpow.pop %v847
    %v849 = vadd.f32 %v848, 1.0
    %v850 = vrcp.pop %v849
    %v851 = vmul.f32 1.0, %v850
    %v852 = vtanh.pop %v845
    %v854 = vrot.slane %v758, 6
    %v856 = vmul.f32 %v851, %v854
    %858 = vrot.lane.b32.xlu0 %v852, 64
    %v859 = vpop.permute.xlu0 %858
    %v861 = vmul.f32 %v851, %v859
    %863 = vrot.lane.b32.xlu0 %v861, 32
    %v864 = vpop.permute.xlu0 %863
    %v866 = vadd.f32 %v856, %v864
    %v867 = vtanh.pop %v866
    %869 = vrot.lane.b32.xlu0 %v867, 64
    %v870 = vpop.permute.xlu0 %869
    %v872 = vmul.f32 %v851, %v870
    %874 = vrot.lane.b32.xlu0 %v872, 32
    %v875 = vpop.permute.xlu0 %874
    %877 = vst.msk [vmem:[#allocation3 + $0x8] sm:$0xc] %vm436, %v875
    %v878 = vrot.slane %v872, 2
    %879 = vrot.lane.b32.xlu0 %v878, 32
    %v880 = vpop.permute.xlu0 %879
    %v881 = vsel %vm224, %v880, 0
    %883 = vmatprep.subr.mxu0 0.0
    %884 = vmatpush1.msra.mxu0 %v220
    %885 = vmatprep.subr.mxu0 0.0
    %886 = vmatpush1.msra.mxu0 %v221
    %887 = vmatprep.subr.mxu0 0.0
    %888 = vmatpush1.msra.mxu0 %v222
    %889 = vmatprep.subr.mxu0 0.0
    %890 = vmatpush1.msra.mxu0 %v223
    %891 = vmatprep.subr.mxu0 0.0
    %892 = vmatpush1.msra.mxu0 0.0
    %893 = vmatprep.subr.mxu0 0.0
    %894 = vmatpush1.msra.mxu0 0.0
    %895 = vmatprep.subr.mxu0 0.0
    %896 = vmatpush1.msra.mxu0 0.0
    %897 = vmatprep.subr.mxu0 0.0
    %898 = vmatpush1.msra.mxu0 0.0
    %899 = vmatprep.subr.mxu0 0.0
    %900 = vmatpush1.msra.mxu0 0.0
    %901 = vmatprep.subr.mxu0 0.0
    %902 = vmatpush1.msra.mxu0 0.0
    %903 = vmatprep.subr.mxu0 0.0
    %904 = vmatpush1.msra.mxu0 0.0
    %905 = vmatprep.subr.mxu0 0.0
    %906 = vmatpush1.msra.mxu0 0.0
    %907 = vmatprep.subr.mxu0 0.0
    %908 = vmatpush1.msra.mxu0 0.0
    %909 = vmatprep.subr.mxu0 0.0
    %910 = vmatpush1.msra.mxu0 0.0
    %911 = vmatprep.subr.mxu0 0.0
    %912 = vmatpush1.msra.mxu0 0.0
    %913 = vmatprep.subr.mxu0 0.0
    %914 = vmatpush1.msra.mxu0 0.0
    %915 = vmatprep.subr.mxu0 0.0
    %916 = vmatpush1.msra.mxu0 0.0
    %917 = vmatprep.subr.mxu0 0.0
    %918 = vmatpush1.msra.mxu0 0.0
    %919 = vmatprep.subr.mxu0 0.0
    %920 = vmatpush1.msra.mxu0 0.0
    %921 = vmatprep.subr.mxu0 0.0
    %922 = vmatpush1.msra.mxu0 0.0
    %923 = vmatprep.subr.mxu0 0.0
    %924 = vmatpush1.msra.mxu0 0.0
    %925 = vmatprep.subr.mxu0 0.0
    %926 = vmatpush1.msra.mxu0 0.0
    %927 = vmatprep.subr.mxu0 0.0
    %928 = vmatpush1.msra.mxu0 0.0
    %929 = vmatprep.subr.mxu0 0.0
    %930 = vmatpush1.msra.mxu0 0.0
    %931 = vmatprep.subr.mxu0 0.0
    %932 = vmatpush1.msra.mxu0 0.0
    %933 = vmatprep.subr.mxu0 0.0
    %934 = vmatpush1.msra.mxu0 0.0
    %935 = vmatprep.subr.mxu0 0.0
    %936 = vmatpush1.msra.mxu0 0.0
    %937 = vmatprep.subr.mxu0 0.0
    %938 = vmatpush1.msra.mxu0 0.0
    %939 = vmatprep.subr.mxu0 0.0
    %940 = vmatpush1.msra.mxu0 0.0
    %941 = vmatprep.subr.mxu0 0.0
    %942 = vmatpush1.msra.mxu0 0.0
    %943 = vmatprep.subr.mxu0 0.0
    %944 = vmatpush1.msra.mxu0 0.0
    %945 = vmatprep.subr.mxu0 0.0
    %946 = vmatpush1.msra.mxu0 0.0
    %947 = vmatprep.mubr.f32.mxu0 0.0
    %948 = vmatmul.mubr.f32.gmra.mrb[0].mxu0 %v881
    %v949 = vpop.f32.mrb[0].mxu0
    %v950 = vadd.f32 0.0, %v949
    %v951 = vpop.f32.mrb[0].mxu0
    %952 = vdwg.mxu0
    %v954 = vrot.slane %v950, 4
    %v956 = vadd.f32 %v217, %v954
    %v957 = vxor.u32 %v956, 2147483648
    %v958 = vmul.f32 %v957, 1.442695
    %v959 = vpow.pop %v958
    %v960 = vadd.f32 %v959, 1.0
    %v961 = vrcp.pop %v960
    %v962 = vmul.f32 1.0, %v961
    %v963 = vtanh.pop %v956
    %v965 = vrot.slane %v866, 6
    %v967 = vmul.f32 %v962, %v965
    %969 = vrot.lane.b32.xlu0 %v963, 64
    %v970 = vpop.permute.xlu0 %969
    %v972 = vmul.f32 %v962, %v970
    %974 = vrot.lane.b32.xlu0 %v972, 32
    %v975 = vpop.permute.xlu0 %974
    %v977 = vadd.f32 %v967, %v975
    %v978 = vtanh.pop %v977
    %980 = vrot.lane.b32.xlu0 %v978, 64
    %v981 = vpop.permute.xlu0 %980
    %v983 = vmul.f32 %v962, %v981
    %985 = vrot.lane.b32.xlu0 %v983, 32
    %v986 = vpop.permute.xlu0 %985
    %988 = vst.msk [vmem:[#allocation3 + $0x8] sm:$0x30] %vm548, %v986
    %v989 = vrot.slane %v983, 4
    %990 = vrot.lane.b32.xlu0 %v989, 32
    %v991 = vpop.permute.xlu0 %990
    %v992 = vsel %vm224, %v991, 0
    %994 = vmatprep.subr.mxu0 0.0
    %995 = vmatpush1.msra.mxu0 %v220
    %996 = vmatprep.subr.mxu0 0.0
    %997 = vmatpush1.msra.mxu0 %v221
    %998 = vmatprep.subr.mxu0 0.0
    %999 = vmatpush1.msra.mxu0 %v222
    %1000 = vmatprep.subr.mxu0 0.0
    %1001 = vmatpush1.msra.mxu0 %v223
    %1002 = vmatprep.subr.mxu0 0.0
    %1003 = vmatpush1.msra.mxu0 0.0
    %1004 = vmatprep.subr.mxu0 0.0
    %1005 = vmatpush1.msra.mxu0 0.0
    %1006 = vmatprep.subr.mxu0 0.0
    %1007 = vmatpush1.msra.mxu0 0.0
    %1008 = vmatprep.subr.mxu0 0.0
    %1009 = vmatpush1.msra.mxu0 0.0
    %1010 = vmatprep.subr.mxu0 0.0
    %1011 = vmatpush1.msra.mxu0 0.0
    %1012 = vmatprep.subr.mxu0 0.0
    %1013 = vmatpush1.msra.mxu0 0.0
    %1014 = vmatprep.subr.mxu0 0.0
    %1015 = vmatpush1.msra.mxu0 0.0
    %1016 = vmatprep.subr.mxu0 0.0
    %1017 = vmatpush1.msra.mxu0 0.0
    %1018 = vmatprep.subr.mxu0 0.0
    %1019 = vmatpush1.msra.mxu0 0.0
    %1020 = vmatprep.subr.mxu0 0.0
    %1021 = vmatpush1.msra.mxu0 0.0
    %1022 = vmatprep.subr.mxu0 0.0
    %1023 = vmatpush1.msra.mxu0 0.0
    %1024 = vmatprep.subr.mxu0 0.0
    %1025 = vmatpush1.msra.mxu0 0.0
    %1026 = vmatprep.subr.mxu0 0.0
    %1027 = vmatpush1.msra.mxu0 0.0
    %1028 = vmatprep.subr.mxu0 0.0
    %1029 = vmatpush1.msra.mxu0 0.0
    %1030 = vmatprep.subr.mxu0 0.0
    %1031 = vmatpush1.msra.mxu0 0.0
    %1032 = vmatprep.subr.mxu0 0.0
    %1033 = vmatpush1.msra.mxu0 0.0
    %1034 = vmatprep.subr.mxu0 0.0
    %1035 = vmatpush1.msra.mxu0 0.0
    %1036 = vmatprep.subr.mxu0 0.0
    %1037 = vmatpush1.msra.mxu0 0.0
    %1038 = vmatprep.subr.mxu0 0.0
    %1039 = vmatpush1.msra.mxu0 0.0
    %1040 = vmatprep.subr.mxu0 0.0
    %1041 = vmatpush1.msra.mxu0 0.0
    %1042 = vmatprep.subr.mxu0 0.0
    %1043 = vmatpush1.msra.mxu0 0.0
    %1044 = vmatprep.subr.mxu0 0.0
    %1045 = vmatpush1.msra.mxu0 0.0
    %1046 = vmatprep.subr.mxu0 0.0
    %1047 = vmatpush1.msra.mxu0 0.0
    %1048 = vmatprep.subr.mxu0 0.0
    %1049 = vmatpush1.msra.mxu0 0.0
    %1050 = vmatprep.subr.mxu0 0.0
    %1051 = vmatpush1.msra.mxu0 0.0
    %1052 = vmatprep.subr.mxu0 0.0
    %1053 = vmatpush1.msra.mxu0 0.0
    %1054 = vmatprep.subr.mxu0 0.0
    %1055 = vmatpush1.msra.mxu0 0.0
    %1056 = vmatprep.subr.mxu0 0.0
    %1057 = vmatpush1.msra.mxu0 0.0
    %1058 = vmatprep.mubr.f32.mxu0 0.0
    %1059 = vmatmul.mubr.f32.gmra.mrb[0].mxu0 %v992
    %v1060 = vpop.f32.mrb[0].mxu0
    %v1061 = vadd.f32 0.0, %v1060
    %v1062 = vpop.f32.mrb[0].mxu0
    %1063 = vdwg.mxu0
    %v1065 = vrot.slane %v1061, 2
    %v1067 = vadd.f32 %v217, %v1065
    %v1068 = vxor.u32 %v1067, 2147483648
    %v1069 = vmul.f32 %v1068, 1.442695
    %v1070 = vpow.pop %v1069
    %v1071 = vadd.f32 %v1070, 1.0
    %v1072 = vrcp.pop %v1071
    %v1073 = vmul.f32 1.0, %v1072
    %v1074 = vtanh.pop %v1067
    %v1076 = vrot.slane %v977, 6
    %v1078 = vmul.f32 %v1073, %v1076
    %1080 = vrot.lane.b32.xlu0 %v1074, 64
    %v1081 = vpop.permute.xlu0 %1080
    %v1083 = vmul.f32 %v1073, %v1081
    %1085 = vrot.lane.b32.xlu0 %v1083, 32
    %v1086 = vpop.permute.xlu0 %1085
    %v1088 = vadd.f32 %v1078, %v1086
    %v1089 = vtanh.pop %v1088
    %1091 = vrot.lane.b32.xlu0 %v1089, 64
    %v1092 = vpop.permute.xlu0 %1091
    %v1094 = vmul.f32 %v1073, %v1092
    %1096 = vrot.lane.b32.xlu0 %v1094, 32
    %v1097 = vpop.permute.xlu0 %1096
    %1099 = vst.msk [vmem:[#allocation3 + $0x8] sm:$0xc0] %vm660, %v1097
    %v1100 = vld [vmem:[#allocation3] sm:$0xff]
    %v1101 = vld [vmem:[#allocation3 + $0x8] sm:$0xff]
    %v1102 = vld [vmem:[%s4] sm:$0xff]
    %v1103 = vld [vmem:[%s4 + $0x8] sm:$0xff]
    %v1104 = vld [vmem:[%s4 + $0x10] sm:$0xff]
    %v1105 = vld [vmem:[%s4 + $0x18] sm:$0xff]
    %v1106 = vld [vmem:[%s6] sm:$0x1]
    %v1108 = vlaneseq
    %v1109 = vshrl.u32 %v1108, 7
    %v1110 = vsub.s32 0, %v1109
    %v1111 = vrot.slane %v1106, %v1110
    %v1114 = vsel %vm224, %v1100, 0
    %v1117 = vsel %vm224, %v1101, 0
    %1119 = vmatprep.subr.mxu0 0.0
    %1120 = vmatpush1.msra.mxu0 %v1102
    %1121 = vmatprep.subr.mxu0 0.0
    %1122 = vmatpush1.msra.mxu0 %v1103
    %1123 = vmatprep.subr.mxu0 0.0
    %1124 = vmatpush1.msra.mxu0 %v1104
    %1125 = vmatprep.subr.mxu0 0.0
    %1126 = vmatpush1.msra.mxu0 %v1105
    %1127 = vmatprep.subr.mxu0 0.0
    %1128 = vmatpush1.msra.mxu0 0.0
    %1129 = vmatprep.subr.mxu0 0.0
    %1130 = vmatpush1.msra.mxu0 0.0
    %1131 = vmatprep.subr.mxu0 0.0
    %1132 = vmatpush1.msra.mxu0 0.0
    %1133 = vmatprep.subr.mxu0 0.0
    %1134 = vmatpush1.msra.mxu0 0.0
    %1135 = vmatprep.subr.mxu0 0.0
    %1136 = vmatpush1.msra.mxu0 0.0
    %1137 = vmatprep.subr.mxu0 0.0
    %1138 = vmatpush1.msra.mxu0 0.0
    %1139 = vmatprep.subr.mxu0 0.0
    %1140 = vmatpush1.msra.mxu0 0.0
    %1141 = vmatprep.subr.mxu0 0.0
    %1142 = vmatpush1.msra.mxu0 0.0
    %1143 = vmatprep.subr.mxu0 0.0
    %1144 = vmatpush1.msra.mxu0 0.0
    %1145 = vmatprep.subr.mxu0 0.0
    %1146 = vmatpush1.msra.mxu0 0.0
    %1147 = vmatprep.subr.mxu0 0.0
    %1148 = vmatpush1.msra.mxu0 0.0
    %1149 = vmatprep.subr.mxu0 0.0
    %1150 = vmatpush1.msra.mxu0 0.0
    %1151 = vmatprep.subr.mxu0 0.0
    %1152 = vmatpush1.msra.mxu0 0.0
    %1153 = vmatprep.subr.mxu0 0.0
    %1154 = vmatpush1.msra.mxu0 0.0
    %1155 = vmatprep.subr.mxu0 0.0
    %1156 = vmatpush1.msra.mxu0 0.0
    %1157 = vmatprep.subr.mxu0 0.0
    %1158 = vmatpush1.msra.mxu0 0.0
    %1159 = vmatprep.subr.mxu0 0.0
    %1160 = vmatpush1.msra.mxu0 0.0
    %1161 = vmatprep.subr.mxu0 0.0
    %1162 = vmatpush1.msra.mxu0 0.0
    %1163 = vmatprep.subr.mxu0 0.0
    %1164 = vmatpush1.msra.mxu0 0.0
    %1165 = vmatprep.subr.mxu0 0.0
    %1166 = vmatpush1.msra.mxu0 0.0
    %1167 = vmatprep.subr.mxu0 0.0
    %1168 = vmatpush1.msra.mxu0 0.0
    %1169 = vmatprep.subr.mxu0 0.0
    %1170 = vmatpush1.msra.mxu0 0.0
    %1171 = vmatprep.subr.mxu0 0.0
    %1172 = vmatpush1.msra.mxu0 0.0
    %1173 = vmatprep.subr.mxu0 0.0
    %1174 = vmatpush1.msra.mxu0 0.0
    %1175 = vmatprep.subr.mxu0 0.0
    %1176 = vmatpush1.msra.mxu0 0.0
    %1177 = vmatprep.subr.mxu0 0.0
    %1178 = vmatpush1.msra.mxu0 0.0
    %1179 = vmatprep.subr.mxu0 0.0
    %1180 = vmatpush1.msra.mxu0 0.0
    %1181 = vmatprep.subr.mxu0 0.0
    %1182 = vmatpush1.msra.mxu0 0.0
    %1183 = vmatprep.mubr.f32.mxu0 0.0
    %1184 = vmatmul.mubr.f32.gmra.mrb[0].mxu0 %v1114
    %v1185 = vpop.f32.mrb[0].mxu0
    %v1186 = vadd.f32 %v1111, %v1185
    %v1187 = vpop.f32.mrb[0].mxu0
    %1188 = vmatprep.mubr.f32.mxu0 0.0
    %1189 = vmatmul.mubr.f32.gmra.mrb[0].mxu0 %v1117
    %v1190 = vpop.f32.mrb[0].mxu0
    %v1191 = vadd.f32 %v1111, %v1190
    %v1192 = vpop.f32.mrb[0].mxu0
    %1193 = vdwg.mxu0
    %v1194 = vld [vmem:[%s5] sm:$0xff]
    %v1195 = vld [vmem:[%s5 + $0x8] sm:$0xff]
    %v1196 = vld [vmem:[%s5 + $0x10] sm:$0xff]
    %v1197 = vld [vmem:[%s5 + $0x18] sm:$0xff]
    %1198 = vmatprep.subr.mxu0 0.0
    %1199 = vmatpush1.msra.mxu0 %v1194
    %1200 = vmatprep.subr.mxu0 0.0
    %1201 = vmatpush1.msra.mxu0 %v1195
    %1202 = vmatprep.subr.mxu0 0.0
    %1203 = vmatpush1.msra.mxu0 %v1196
    %1204 = vmatprep.subr.mxu0 0.0
    %1205 = vmatpush1.msra.mxu0 %v1197
    %1206 = vmatprep.subr.mxu0 0.0
    %1207 = vmatpush1.msra.mxu0 0.0
    %1208 = vmatprep.subr.mxu0 0.0
    %1209 = vmatpush1.msra.mxu0 0.0
    %1210 = vmatprep.subr.mxu0 0.0
    %1211 = vmatpush1.msra.mxu0 0.0
    %1212 = vmatprep.subr.mxu0 0.0
    %1213 = vmatpush1.msra.mxu0 0.0
    %1214 = vmatprep.subr.mxu0 0.0
    %1215 = vmatpush1.msra.mxu0 0.0
    %1216 = vmatprep.subr.mxu0 0.0
    %1217 = vmatpush1.msra.mxu0 0.0
    %1218 = vmatprep.subr.mxu0 0.0
    %1219 = vmatpush1.msra.mxu0 0.0
    %1220 = vmatprep.subr.mxu0 0.0
    %1221 = vmatpush1.msra.mxu0 0.0
    %1222 = vmatprep.subr.mxu0 0.0
    %1223 = vmatpush1.msra.mxu0 0.0
    %1224 = vmatprep.subr.mxu0 0.0
    %1225 = vmatpush1.msra.mxu0 0.0
    %1226 = vmatprep.subr.mxu0 0.0
    %1227 = vmatpush1.msra.mxu0 0.0
    %1228 = vmatprep.subr.mxu0 0.0
    %1229 = vmatpush1.msra.mxu0 0.0
    %1230 = vmatprep.subr.mxu0 0.0
    %1231 = vmatpush1.msra.mxu0 0.0
    %1232 = vmatprep.subr.mxu0 0.0
    %1233 = vmatpush1.msra.mxu0 0.0
    %1234 = vmatprep.subr.mxu0 0.0
    %1235 = vmatpush1.msra.mxu0 0.0
    %1236 = vmatprep.subr.mxu0 0.0
    %1237 = vmatpush1.msra.mxu0 0.0
    %1238 = vmatprep.subr.mxu0 0.0
    %1239 = vmatpush1.msra.mxu0 0.0
    %1240 = vmatprep.subr.mxu0 0.0
    %1241 = vmatpush1.msra.mxu0 0.0
    %1242 = vmatprep.subr.mxu0 0.0
    %1243 = vmatpush1.msra.mxu0 0.0
    %1244 = vmatprep.subr.mxu0 0.0
    %1245 = vmatpush1.msra.mxu0 0.0
    %1246 = vmatprep.subr.mxu0 0.0
    %1247 = vmatpush1.msra.mxu0 0.0
    %1248 = vmatprep.subr.mxu0 0.0
    %1249 = vmatpush1.msra.mxu0 0.0
    %1250 = vmatprep.subr.mxu0 0.0
    %1251 = vmatpush1.msra.mxu0 0.0
    %1252 = vmatprep.subr.mxu0 0.0
    %1253 = vmatpush1.msra.mxu0 0.0
    %1254 = vmatprep.subr.mxu0 0.0
    %1255 = vmatpush1.msra.mxu0 0.0
    %1256 = vmatprep.subr.mxu0 0.0
    %1257 = vmatpush1.msra.mxu0 0.0
    %1258 = vmatprep.subr.mxu0 0.0
    %1259 = vmatpush1.msra.mxu0 0.0
    %1260 = vmatprep.subr.mxu0 0.0
    %1261 = vmatpush1.msra.mxu0 0.0
    %1262 = vmatprep.mubr.f32.mxu0 0.0
    %1263 = vmatmul.mubr.f32.gmra.mrb[0].mxu0 %v226
    %v1264 = vpop.f32.mrb[0].mxu0
    %v1265 = vadd.f32 0.0, %v1264
    %v1266 = vpop.f32.mrb[0].mxu0
    %1267 = vdwg.mxu0
    %v1268 = vadd.f32 %v1186, %v1265
    %v1269 = vxor.u32 %v1268, 2147483648
    %v1270 = vmul.f32 %v1269, 1.442695
    %v1271 = vpow.pop %v1270
    %v1272 = vadd.f32 %v1271, 1.0
    %v1273 = vrcp.pop %v1272
    %v1274 = vmul.f32 1.0, %v1273
    %v1275 = vtanh.pop %v1268
    %v1276 = vmul.f32 %v1274, 0.0
    %1278 = vrot.lane.b32.xlu0 %v1275, 64
    %v1279 = vpop.permute.xlu0 %1278
    %v1281 = vmul.f32 %v1274, %v1279
    %1283 = vrot.lane.b32.xlu0 %v1281, 32
    %v1284 = vpop.permute.xlu0 %1283
    %v1286 = vadd.f32 %v1276, %v1284
    %v1287 = vtanh.pop %v1286
    %1289 = vrot.lane.b32.xlu0 %v1287, 64
    %v1290 = vpop.permute.xlu0 %1289
    %v1292 = vmul.f32 %v1274, %v1290
    %1294 = vrot.lane.b32.xlu0 %v1292, 32
    %v1295 = vpop.permute.xlu0 %1294
    %v1296 = vsel %vm224, %v1295, 0
    %1298 = vmatprep.subr.mxu0 0.0
    %1299 = vmatpush1.msra.mxu0 %v1194
    %1300 = vmatprep.subr.mxu0 0.0
    %1301 = vmatpush1.msra.mxu0 %v1195
    %1302 = vmatprep.subr.mxu0 0.0
    %1303 = vmatpush1.msra.mxu0 %v1196
    %1304 = vmatprep.subr.mxu0 0.0
    %1305 = vmatpush1.msra.mxu0 %v1197
    %1306 = vmatprep.subr.mxu0 0.0
    %1307 = vmatpush1.msra.mxu0 0.0
    %1308 = vmatprep.subr.mxu0 0.0
    %1309 = vmatpush1.msra.mxu0 0.0
    %1310 = vmatprep.subr.mxu0 0.0
    %1311 = vmatpush1.msra.mxu0 0.0
    %1312 = vmatprep.subr.mxu0 0.0
    %1313 = vmatpush1.msra.mxu0 0.0
    %1314 = vmatprep.subr.mxu0 0.0
    %1315 = vmatpush1.msra.mxu0 0.0
    %1316 = vmatprep.subr.mxu0 0.0
    %1317 = vmatpush1.msra.mxu0 0.0
    %1318 = vmatprep.subr.mxu0 0.0
    %1319 = vmatpush1.msra.mxu0 0.0
    %1320 = vmatprep.subr.mxu0 0.0
    %1321 = vmatpush1.msra.mxu0 0.0
    %1322 = vmatprep.subr.mxu0 0.0
    %1323 = vmatpush1.msra.mxu0 0.0
    %1324 = vmatprep.subr.mxu0 0.0
    %1325 = vmatpush1.msra.mxu0 0.0
    %1326 = vmatprep.subr.mxu0 0.0
    %1327 = vmatpush1.msra.mxu0 0.0
    %1328 = vmatprep.subr.mxu0 0.0
    %1329 = vmatpush1.msra.mxu0 0.0
    %1330 = vmatprep.subr.mxu0 0.0
    %1331 = vmatpush1.msra.mxu0 0.0
    %1332 = vmatprep.subr.mxu0 0.0
    %1333 = vmatpush1.msra.mxu0 0.0
    %1334 = vmatprep.subr.mxu0 0.0
    %1335 = vmatpush1.msra.mxu0 0.0
    %1336 = vmatprep.subr.mxu0 0.0
    %1337 = vmatpush1.msra.mxu0 0.0
    %1338 = vmatprep.subr.mxu0 0.0
    %1339 = vmatpush1.msra.mxu0 0.0
    %1340 = vmatprep.subr.mxu0 0.0
    %1341 = vmatpush1.msra.mxu0 0.0
    %1342 = vmatprep.subr.mxu0 0.0
    %1343 = vmatpush1.msra.mxu0 0.0
    %1344 = vmatprep.subr.mxu0 0.0
    %1345 = vmatpush1.msra.mxu0 0.0
    %1346 = vmatprep.subr.mxu0 0.0
    %1347 = vmatpush1.msra.mxu0 0.0
    %1348 = vmatprep.subr.mxu0 0.0
    %1349 = vmatpush1.msra.mxu0 0.0
    %1350 = vmatprep.subr.mxu0 0.0
    %1351 = vmatpush1.msra.mxu0 0.0
    %1352 = vmatprep.subr.mxu0 0.0
    %1353 = vmatpush1.msra.mxu0 0.0
    %1354 = vmatprep.subr.mxu0 0.0
    %1355 = vmatpush1.msra.mxu0 0.0
    %1356 = vmatprep.subr.mxu0 0.0
    %1357 = vmatpush1.msra.mxu0 0.0
    %1358 = vmatprep.subr.mxu0 0.0
    %1359 = vmatpush1.msra.mxu0 0.0
    %1360 = vmatprep.subr.mxu0 0.0
    %1361 = vmatpush1.msra.mxu0 0.0
    %1362 = vmatprep.mubr.f32.mxu0 0.0
    %1363 = vmatmul.mubr.f32.gmra.mrb[0].mxu0 %v1296
    %v1364 = vpop.f32.mrb[0].mxu0
    %v1365 = vadd.f32 0.0, %v1364
    %v1366 = vpop.f32.mrb[0].mxu0
    %1367 = vdwg.mxu0
    %v1369 = vrot.slane %v1365, 6
    %v1371 = vadd.f32 %v1186, %v1369
    %v1372 = vxor.u32 %v1371, 2147483648
    %v1373 = vmul.f32 %v1372, 1.442695
    %v1374 = vpow.pop %v1373
    %v1375 = vadd.f32 %v1374, 1.0
    %v1376 = vrcp.pop %v1375
    %v1377 = vmul.f32 1.0, %v1376
    %v1378 = vtanh.pop %v1371
    %v1380 = vrot.slane %v1286, 6
    %v1382 = vmul.f32 %v1377, %v1380
    %1384 = vrot.lane.b32.xlu0 %v1378, 64
    %v1385 = vpop.permute.xlu0 %1384
    %v1387 = vmul.f32 %v1377, %v1385
    %1389 = vrot.lane.b32.xlu0 %v1387, 32
    %v1390 = vpop.permute.xlu0 %1389
    %v1392 = vadd.f32 %v1382, %v1390
    %v1393 = vtanh.pop %v1392
    %1395 = vrot.lane.b32.xlu0 %v1393, 64
    %v1396 = vpop.permute.xlu0 %1395
    %v1398 = vmul.f32 %v1377, %v1396
    %v1400 = vrot.slane %v1398, 2
    %1401 = vrot.lane.b32.xlu0 %v1400, 32
    %v1402 = vpop.permute.xlu0 %1401
    %v1403 = vsel %vm224, %v1402, 0
    %1405 = vmatprep.subr.mxu0 0.0
    %1406 = vmatpush1.msra.mxu0 %v1194
    %1407 = vmatprep.subr.mxu0 0.0
    %1408 = vmatpush1.msra.mxu0 %v1195
    %1409 = vmatprep.subr.mxu0 0.0
    %1410 = vmatpush1.msra.mxu0 %v1196
    %1411 = vmatprep.subr.mxu0 0.0
    %1412 = vmatpush1.msra.mxu0 %v1197
    %1413 = vmatprep.subr.mxu0 0.0
    %1414 = vmatpush1.msra.mxu0 0.0
    %1415 = vmatprep.subr.mxu0 0.0
    %1416 = vmatpush1.msra.mxu0 0.0
    %1417 = vmatprep.subr.mxu0 0.0
    %1418 = vmatpush1.msra.mxu0 0.0
    %1419 = vmatprep.subr.mxu0 0.0
    %1420 = vmatpush1.msra.mxu0 0.0
    %1421 = vmatprep.subr.mxu0 0.0
    %1422 = vmatpush1.msra.mxu0 0.0
    %1423 = vmatprep.subr.mxu0 0.0
    %1424 = vmatpush1.msra.mxu0 0.0
    %1425 = vmatprep.subr.mxu0 0.0
    %1426 = vmatpush1.msra.mxu0 0.0
    %1427 = vmatprep.subr.mxu0 0.0
    %1428 = vmatpush1.msra.mxu0 0.0
    %1429 = vmatprep.subr.mxu0 0.0
    %1430 = vmatpush1.msra.mxu0 0.0
    %1431 = vmatprep.subr.mxu0 0.0
    %1432 = vmatpush1.msra.mxu0 0.0
    %1433 = vmatprep.subr.mxu0 0.0
    %1434 = vmatpush1.msra.mxu0 0.0
    %1435 = vmatprep.subr.mxu0 0.0
    %1436 = vmatpush1.msra.mxu0 0.0
    %1437 = vmatprep.subr.mxu0 0.0
    %1438 = vmatpush1.msra.mxu0 0.0
    %1439 = vmatprep.subr.mxu0 0.0
    %1440 = vmatpush1.msra.mxu0 0.0
    %1441 = vmatprep.subr.mxu0 0.0
    %1442 = vmatpush1.msra.mxu0 0.0
    %1443 = vmatprep.subr.mxu0 0.0
    %1444 = vmatpush1.msra.mxu0 0.0
    %1445 = vmatprep.subr.mxu0 0.0
    %1446 = vmatpush1.msra.mxu0 0.0
    %1447 = vmatprep.subr.mxu0 0.0
    %1448 = vmatpush1.msra.mxu0 0.0
    %1449 = vmatprep.subr.mxu0 0.0
    %1450 = vmatpush1.msra.mxu0 0.0
    %1451 = vmatprep.subr.mxu0 0.0
    %1452 = vmatpush1.msra.mxu0 0.0
    %1453 = vmatprep.subr.mxu0 0.0
    %1454 = vmatpush1.msra.mxu0 0.0
    %1455 = vmatprep.subr.mxu0 0.0
    %1456 = vmatpush1.msra.mxu0 0.0
    %1457 = vmatprep.subr.mxu0 0.0
    %1458 = vmatpush1.msra.mxu0 0.0
    %1459 = vmatprep.subr.mxu0 0.0
    %1460 = vmatpush1.msra.mxu0 0.0
    %1461 = vmatprep.subr.mxu0 0.0
    %1462 = vmatpush1.msra.mxu0 0.0
    %1463 = vmatprep.subr.mxu0 0.0
    %1464 = vmatpush1.msra.mxu0 0.0
    %1465 = vmatprep.subr.mxu0 0.0
    %1466 = vmatpush1.msra.mxu0 0.0
    %1467 = vmatprep.subr.mxu0 0.0
    %1468 = vmatpush1.msra.mxu0 0.0
    %1469 = vmatprep.mubr.f32.mxu0 0.0
    %1470 = vmatmul.mubr.f32.gmra.mrb[0].mxu0 %v1403
    %v1471 = vpop.f32.mrb[0].mxu0
    %v1472 = vadd.f32 0.0, %v1471
    %v1473 = vpop.f32.mrb[0].mxu0
    %1474 = vdwg.mxu0
    %v1476 = vrot.slane %v1472, 4
    %v1478 = vadd.f32 %v1186, %v1476
    %v1479 = vxor.u32 %v1478, 2147483648
    %v1480 = vmul.f32 %v1479, 1.442695
    %v1481 = vpow.pop %v1480
    %v1482 = vadd.f32 %v1481, 1.0
    %v1483 = vrcp.pop %v1482
    %v1484 = vmul.f32 1.0, %v1483
    %v1485 = vtanh.pop %v1478
    %v1487 = vrot.slane %v1392, 6
    %v1489 = vmul.f32 %v1484, %v1487
    %1491 = vrot.lane.b32.xlu0 %v1485, 64
    %v1492 = vpop.permute.xlu0 %1491
    %v1494 = vmul.f32 %v1484, %v1492
    %1496 = vrot.lane.b32.xlu0 %v1494, 32
    %v1497 = vpop.permute.xlu0 %1496
    %v1499 = vadd.f32 %v1489, %v1497
    %v1500 = vtanh.pop %v1499
    %1502 = vrot.lane.b32.xlu0 %v1500, 64
    %v1503 = vpop.permute.xlu0 %1502
    %v1505 = vmul.f32 %v1484, %v1503
    %v1507 = vrot.slane %v1505, 4
    %1508 = vrot.lane.b32.xlu0 %v1507, 32
    %v1509 = vpop.permute.xlu0 %1508
    %v1510 = vsel %vm224, %v1509, 0
    %1512 = vmatprep.subr.mxu0 0.0
    %1513 = vmatpush1.msra.mxu0 %v1194
    %1514 = vmatprep.subr.mxu0 0.0
    %1515 = vmatpush1.msra.mxu0 %v1195
    %1516 = vmatprep.subr.mxu0 0.0
    %1517 = vmatpush1.msra.mxu0 %v1196
    %1518 = vmatprep.subr.mxu0 0.0
    %1519 = vmatpush1.msra.mxu0 %v1197
    %1520 = vmatprep.subr.mxu0 0.0
    %1521 = vmatpush1.msra.mxu0 0.0
    %1522 = vmatprep.subr.mxu0 0.0
    %1523 = vmatpush1.msra.mxu0 0.0
    %1524 = vmatprep.subr.mxu0 0.0
    %1525 = vmatpush1.msra.mxu0 0.0
    %1526 = vmatprep.subr.mxu0 0.0
    %1527 = vmatpush1.msra.mxu0 0.0
    %1528 = vmatprep.subr.mxu0 0.0
    %1529 = vmatpush1.msra.mxu0 0.0
    %1530 = vmatprep.subr.mxu0 0.0
    %1531 = vmatpush1.msra.mxu0 0.0
    %1532 = vmatprep.subr.mxu0 0.0
    %1533 = vmatpush1.msra.mxu0 0.0
    %1534 = vmatprep.subr.mxu0 0.0
    %1535 = vmatpush1.msra.mxu0 0.0
    %1536 = vmatprep.subr.mxu0 0.0
    %1537 = vmatpush1.msra.mxu0 0.0
    %1538 = vmatprep.subr.mxu0 0.0
    %1539 = vmatpush1.msra.mxu0 0.0
    %1540 = vmatprep.subr.mxu0 0.0
    %1541 = vmatpush1.msra.mxu0 0.0
    %1542 = vmatprep.subr.mxu0 0.0
    %1543 = vmatpush1.msra.mxu0 0.0
    %1544 = vmatprep.subr.mxu0 0.0
    %1545 = vmatpush1.msra.mxu0 0.0
    %1546 = vmatprep.subr.mxu0 0.0
    %1547 = vmatpush1.msra.mxu0 0.0
    %1548 = vmatprep.subr.mxu0 0.0
    %1549 = vmatpush1.msra.mxu0 0.0
    %1550 = vmatprep.subr.mxu0 0.0
    %1551 = vmatpush1.msra.mxu0 0.0
    %1552 = vmatprep.subr.mxu0 0.0
    %1553 = vmatpush1.msra.mxu0 0.0
    %1554 = vmatprep.subr.mxu0 0.0
    %1555 = vmatpush1.msra.mxu0 0.0
    %1556 = vmatprep.subr.mxu0 0.0
    %1557 = vmatpush1.msra.mxu0 0.0
    %1558 = vmatprep.subr.mxu0 0.0
    %1559 = vmatpush1.msra.mxu0 0.0
    %1560 = vmatprep.subr.mxu0 0.0
    %1561 = vmatpush1.msra.mxu0 0.0
    %1562 = vmatprep.subr.mxu0 0.0
    %1563 = vmatpush1.msra.mxu0 0.0
    %1564 = vmatprep.subr.mxu0 0.0
    %1565 = vmatpush1.msra.mxu0 0.0
    %1566 = vmatprep.subr.mxu0 0.0
    %1567 = vmatpush1.msra.mxu0 0.0
    %1568 = vmatprep.subr.mxu0 0.0
    %1569 = vmatpush1.msra.mxu0 0.0
    %1570 = vmatprep.subr.mxu0 0.0
    %1571 = vmatpush1.msra.mxu0 0.0
    %1572 = vmatprep.subr.mxu0 0.0
    %1573 = vmatpush1.msra.mxu0 0.0
    %1574 = vmatprep.subr.mxu0 0.0
    %1575 = vmatpush1.msra.mxu0 0.0
    %1576 = vmatprep.mubr.f32.mxu0 0.0
    %1577 = vmatmul.mubr.f32.gmra.mrb[0].mxu0 %v1510
    %v1578 = vpop.f32.mrb[0].mxu0
    %v1579 = vadd.f32 0.0, %v1578
    %v1580 = vpop.f32.mrb[0].mxu0
    %1581 = vdwg.mxu0
    %v1583 = vrot.slane %v1579, 2
    %v1585 = vadd.f32 %v1186, %v1583
    %v1586 = vxor.u32 %v1585, 2147483648
    %v1587 = vmul.f32 %v1586, 1.442695
    %v1588 = vpow.pop %v1587
    %v1589 = vadd.f32 %v1588, 1.0
    %v1590 = vrcp.pop %v1589
    %v1591 = vmul.f32 1.0, %v1590
    %v1592 = vtanh.pop %v1585
    %v1594 = vrot.slane %v1499, 6
    %v1596 = vmul.f32 %v1591, %v1594
    %1598 = vrot.lane.b32.xlu0 %v1592, 64
    %v1599 = vpop.permute.xlu0 %1598
    %v1601 = vmul.f32 %v1591, %v1599
    %1603 = vrot.lane.b32.xlu0 %v1601, 32
    %v1604 = vpop.permute.xlu0 %1603
    %v1606 = vadd.f32 %v1596, %v1604
    %v1607 = vtanh.pop %v1606
    %1609 = vrot.lane.b32.xlu0 %v1607, 64
    %v1610 = vpop.permute.xlu0 %1609
    %v1612 = vmul.f32 %v1591, %v1610
    %v1614 = vrot.slane %v1612, 6
    %1615 = vrot.lane.b32.xlu0 %v1614, 32
    %v1616 = vpop.permute.xlu0 %1615
    %v1617 = vsel %vm224, %v1616, 0
    %1619 = vmatprep.subr.mxu0 0.0
    %1620 = vmatpush1.msra.mxu0 %v1194
    %1621 = vmatprep.subr.mxu0 0.0
    %1622 = vmatpush1.msra.mxu0 %v1195
    %1623 = vmatprep.subr.mxu0 0.0
    %1624 = vmatpush1.msra.mxu0 %v1196
    %1625 = vmatprep.subr.mxu0 0.0
    %1626 = vmatpush1.msra.mxu0 %v1197
    %1627 = vmatprep.subr.mxu0 0.0
    %1628 = vmatpush1.msra.mxu0 0.0
    %1629 = vmatprep.subr.mxu0 0.0
    %1630 = vmatpush1.msra.mxu0 0.0
    %1631 = vmatprep.subr.mxu0 0.0
    %1632 = vmatpush1.msra.mxu0 0.0
    %1633 = vmatprep.subr.mxu0 0.0
    %1634 = vmatpush1.msra.mxu0 0.0
    %1635 = vmatprep.subr.mxu0 0.0
    %1636 = vmatpush1.msra.mxu0 0.0
    %1637 = vmatprep.subr.mxu0 0.0
    %1638 = vmatpush1.msra.mxu0 0.0
    %1639 = vmatprep.subr.mxu0 0.0
    %1640 = vmatpush1.msra.mxu0 0.0
    %1641 = vmatprep.subr.mxu0 0.0
    %1642 = vmatpush1.msra.mxu0 0.0
    %1643 = vmatprep.subr.mxu0 0.0
    %1644 = vmatpush1.msra.mxu0 0.0
    %1645 = vmatprep.subr.mxu0 0.0
    %1646 = vmatpush1.msra.mxu0 0.0
    %1647 = vmatprep.subr.mxu0 0.0
    %1648 = vmatpush1.msra.mxu0 0.0
    %1649 = vmatprep.subr.mxu0 0.0
    %1650 = vmatpush1.msra.mxu0 0.0
    %1651 = vmatprep.subr.mxu0 0.0
    %1652 = vmatpush1.msra.mxu0 0.0
    %1653 = vmatprep.subr.mxu0 0.0
    %1654 = vmatpush1.msra.mxu0 0.0
    %1655 = vmatprep.subr.mxu0 0.0
    %1656 = vmatpush1.msra.mxu0 0.0
    %1657 = vmatprep.subr.mxu0 0.0
    %1658 = vmatpush1.msra.mxu0 0.0
    %1659 = vmatprep.subr.mxu0 0.0
    %1660 = vmatpush1.msra.mxu0 0.0
    %1661 = vmatprep.subr.mxu0 0.0
    %1662 = vmatpush1.msra.mxu0 0.0
    %1663 = vmatprep.subr.mxu0 0.0
    %1664 = vmatpush1.msra.mxu0 0.0
    %1665 = vmatprep.subr.mxu0 0.0
    %1666 = vmatpush1.msra.mxu0 0.0
    %1667 = vmatprep.subr.mxu0 0.0
    %1668 = vmatpush1.msra.mxu0 0.0
    %1669 = vmatprep.subr.mxu0 0.0
    %1670 = vmatpush1.msra.mxu0 0.0
    %1671 = vmatprep.subr.mxu0 0.0
    %1672 = vmatpush1.msra.mxu0 0.0
    %1673 = vmatprep.subr.mxu0 0.0
    %1674 = vmatpush1.msra.mxu0 0.0
    %1675 = vmatprep.subr.mxu0 0.0
    %1676 = vmatpush1.msra.mxu0 0.0
    %1677 = vmatprep.subr.mxu0 0.0
    %1678 = vmatpush1.msra.mxu0 0.0
    %1679 = vmatprep.subr.mxu0 0.0
    %1680 = vmatpush1.msra.mxu0 0.0
    %1681 = vmatprep.subr.mxu0 0.0
    %1682 = vmatpush1.msra.mxu0 0.0
    %1683 = vmatprep.mubr.f32.mxu0 0.0
    %1684 = vmatmul.mubr.f32.gmra.mrb[0].mxu0 %v1617
    %v1685 = vpop.f32.mrb[0].mxu0
    %v1686 = vadd.f32 0.0, %v1685
    %v1687 = vpop.f32.mrb[0].mxu0
    %1688 = vdwg.mxu0
    %v1689 = vadd.f32 %v1191, %v1686
    %v1690 = vxor.u32 %v1689, 2147483648
    %v1691 = vmul.f32 %v1690, 1.442695
    %v1692 = vpow.pop %v1691
    %v1693 = vadd.f32 %v1692, 1.0
    %v1694 = vrcp.pop %v1693
    %v1695 = vmul.f32 1.0, %v1694
    %v1696 = vtanh.pop %v1689
    %v1698 = vrot.slane %v1606, 6
    %v1700 = vmul.f32 %v1695, %v1698
    %1702 = vrot.lane.b32.xlu0 %v1696, 64
    %v1703 = vpop.permute.xlu0 %1702
    %v1705 = vmul.f32 %v1695, %v1703
    %1707 = vrot.lane.b32.xlu0 %v1705, 32
    %v1708 = vpop.permute.xlu0 %1707
    %v1710 = vadd.f32 %v1700, %v1708
    %v1711 = vtanh.pop %v1710
    %1713 = vrot.lane.b32.xlu0 %v1711, 64
    %v1714 = vpop.permute.xlu0 %1713
    %v1716 = vmul.f32 %v1695, %v1714
    %1718 = vrot.lane.b32.xlu0 %v1716, 32
    %v1719 = vpop.permute.xlu0 %1718
    %v1720 = vsel %vm224, %v1719, 0
    %1722 = vmatprep.subr.mxu0 0.0
    %1723 = vmatpush1.msra.mxu0 %v1194
    %1724 = vmatprep.subr.mxu0 0.0
    %1725 = vmatpush1.msra.mxu0 %v1195
    %1726 = vmatprep.subr.mxu0 0.0
    %1727 = vmatpush1.msra.mxu0 %v1196
    %1728 = vmatprep.subr.mxu0 0.0
    %1729 = vmatpush1.msra.mxu0 %v1197
    %1730 = vmatprep.subr.mxu0 0.0
    %1731 = vmatpush1.msra.mxu0 0.0
    %1732 = vmatprep.subr.mxu0 0.0
    %1733 = vmatpush1.msra.mxu0 0.0
    %1734 = vmatprep.subr.mxu0 0.0
    %1735 = vmatpush1.msra.mxu0 0.0
    %1736 = vmatprep.subr.mxu0 0.0
    %1737 = vmatpush1.msra.mxu0 0.0
    %1738 = vmatprep.subr.mxu0 0.0
    %1739 = vmatpush1.msra.mxu0 0.0
    %1740 = vmatprep.subr.mxu0 0.0
    %1741 = vmatpush1.msra.mxu0 0.0
    %1742 = vmatprep.subr.mxu0 0.0
    %1743 = vmatpush1.msra.mxu0 0.0
    %1744 = vmatprep.subr.mxu0 0.0
    %1745 = vmatpush1.msra.mxu0 0.0
    %1746 = vmatprep.subr.mxu0 0.0
    %1747 = vmatpush1.msra.mxu0 0.0
    %1748 = vmatprep.subr.mxu0 0.0
    %1749 = vmatpush1.msra.mxu0 0.0
    %1750 = vmatprep.subr.mxu0 0.0
    %1751 = vmatpush1.msra.mxu0 0.0
    %1752 = vmatprep.subr.mxu0 0.0
    %1753 = vmatpush1.msra.mxu0 0.0
    %1754 = vmatprep.subr.mxu0 0.0
    %1755 = vmatpush1.msra.mxu0 0.0
    %1756 = vmatprep.subr.mxu0 0.0
    %1757 = vmatpush1.msra.mxu0 0.0
    %1758 = vmatprep.subr.mxu0 0.0
    %1759 = vmatpush1.msra.mxu0 0.0
    %1760 = vmatprep.subr.mxu0 0.0
    %1761 = vmatpush1.msra.mxu0 0.0
    %1762 = vmatprep.subr.mxu0 0.0
    %1763 = vmatpush1.msra.mxu0 0.0
    %1764 = vmatprep.subr.mxu0 0.0
    %1765 = vmatpush1.msra.mxu0 0.0
    %1766 = vmatprep.subr.mxu0 0.0
    %1767 = vmatpush1.msra.mxu0 0.0
    %1768 = vmatprep.subr.mxu0 0.0
    %1769 = vmatpush1.msra.mxu0 0.0
    %1770 = vmatprep.subr.mxu0 0.0
    %1771 = vmatpush1.msra.mxu0 0.0
    %1772 = vmatprep.subr.mxu0 0.0
    %1773 = vmatpush1.msra.mxu0 0.0
    %1774 = vmatprep.subr.mxu0 0.0
    %1775 = vmatpush1.msra.mxu0 0.0
    %1776 = vmatprep.subr.mxu0 0.0
    %1777 = vmatpush1.msra.mxu0 0.0
    %1778 = vmatprep.subr.mxu0 0.0
    %1779 = vmatpush1.msra.mxu0 0.0
    %1780 = vmatprep.subr.mxu0 0.0
    %1781 = vmatpush1.msra.mxu0 0.0
    %1782 = vmatprep.subr.mxu0 0.0
    %1783 = vmatpush1.msra.mxu0 0.0
    %1784 = vmatprep.subr.mxu0 0.0
    %1785 = vmatpush1.msra.mxu0 0.0
    %1786 = vmatprep.mubr.f32.mxu0 0.0
    %1787 = vmatmul.mubr.f32.gmra.mrb[0].mxu0 %v1720
    %v1788 = vpop.f32.mrb[0].mxu0
    %v1789 = vadd.f32 0.0, %v1788
    %v1790 = vpop.f32.mrb[0].mxu0
    %1791 = vdwg.mxu0
    %v1793 = vrot.slane %v1789, 6
    %v1795 = vadd.f32 %v1191, %v1793
    %v1796 = vxor.u32 %v1795, 2147483648
    %v1797 = vmul.f32 %v1796, 1.442695
    %v1798 = vpow.pop %v1797
    %v1799 = vadd.f32 %v1798, 1.0
    %v1800 = vrcp.pop %v1799
    %v1801 = vmul.f32 1.0, %v1800
    %v1802 = vtanh.pop %v1795
    %v1804 = vrot.slane %v1710, 6
    %v1806 = vmul.f32 %v1801, %v1804
    %1808 = vrot.lane.b32.xlu0 %v1802, 64
    %v1809 = vpop.permute.xlu0 %1808
    %v1811 = vmul.f32 %v1801, %v1809
    %1813 = vrot.lane.b32.xlu0 %v1811, 32
    %v1814 = vpop.permute.xlu0 %1813
    %v1816 = vadd.f32 %v1806, %v1814
    %v1817 = vtanh.pop %v1816
    %1819 = vrot.lane.b32.xlu0 %v1817, 64
    %v1820 = vpop.permute.xlu0 %1819
    %v1822 = vmul.f32 %v1801, %v1820
    %v1824 = vrot.slane %v1822, 2
    %1825 = vrot.lane.b32.xlu0 %v1824, 32
    %v1826 = vpop.permute.xlu0 %1825
    %v1827 = vsel %vm224, %v1826, 0
    %1829 = vmatprep.subr.mxu0 0.0
    %1830 = vmatpush1.msra.mxu0 %v1194
    %1831 = vmatprep.subr.mxu0 0.0
    %1832 = vmatpush1.msra.mxu0 %v1195
    %1833 = vmatprep.subr.mxu0 0.0
    %1834 = vmatpush1.msra.mxu0 %v1196
    %1835 = vmatprep.subr.mxu0 0.0
    %1836 = vmatpush1.msra.mxu0 %v1197
    %1837 = vmatprep.subr.mxu0 0.0
    %1838 = vmatpush1.msra.mxu0 0.0
    %1839 = vmatprep.subr.mxu0 0.0
    %1840 = vmatpush1.msra.mxu0 0.0
    %1841 = vmatprep.subr.mxu0 0.0
    %1842 = vmatpush1.msra.mxu0 0.0
    %1843 = vmatprep.subr.mxu0 0.0
    %1844 = vmatpush1.msra.mxu0 0.0
    %1845 = vmatprep.subr.mxu0 0.0
    %1846 = vmatpush1.msra.mxu0 0.0
    %1847 = vmatprep.subr.mxu0 0.0
    %1848 = vmatpush1.msra.mxu0 0.0
    %1849 = vmatprep.subr.mxu0 0.0
    %1850 = vmatpush1.msra.mxu0 0.0
    %1851 = vmatprep.subr.mxu0 0.0
    %1852 = vmatpush1.msra.mxu0 0.0
    %1853 = vmatprep.subr.mxu0 0.0
    %1854 = vmatpush1.msra.mxu0 0.0
    %1855 = vmatprep.subr.mxu0 0.0
    %1856 = vmatpush1.msra.mxu0 0.0
    %1857 = vmatprep.subr.mxu0 0.0
    %1858 = vmatpush1.msra.mxu0 0.0
    %1859 = vmatprep.subr.mxu0 0.0
    %1860 = vmatpush1.msra.mxu0 0.0
    %1861 = vmatprep.subr.mxu0 0.0
    %1862 = vmatpush1.msra.mxu0 0.0
    %1863 = vmatprep.subr.mxu0 0.0
    %1864 = vmatpush1.msra.mxu0 0.0
    %1865 = vmatprep.subr.mxu0 0.0
    %1866 = vmatpush1.msra.mxu0 0.0
    %1867 = vmatprep.subr.mxu0 0.0
    %1868 = vmatpush1.msra.mxu0 0.0
    %1869 = vmatprep.subr.mxu0 0.0
    %1870 = vmatpush1.msra.mxu0 0.0
    %1871 = vmatprep.subr.mxu0 0.0
    %1872 = vmatpush1.msra.mxu0 0.0
    %1873 = vmatprep.subr.mxu0 0.0
    %1874 = vmatpush1.msra.mxu0 0.0
    %1875 = vmatprep.subr.mxu0 0.0
    %1876 = vmatpush1.msra.mxu0 0.0
    %1877 = vmatprep.subr.mxu0 0.0
    %1878 = vmatpush1.msra.mxu0 0.0
    %1879 = vmatprep.subr.mxu0 0.0
    %1880 = vmatpush1.msra.mxu0 0.0
    %1881 = vmatprep.subr.mxu0 0.0
    %1882 = vmatpush1.msra.mxu0 0.0
    %1883 = vmatprep.subr.mxu0 0.0
    %1884 = vmatpush1.msra.mxu0 0.0
    %1885 = vmatprep.subr.mxu0 0.0
    %1886 = vmatpush1.msra.mxu0 0.0
    %1887 = vmatprep.subr.mxu0 0.0
    %1888 = vmatpush1.msra.mxu0 0.0
    %1889 = vmatprep.subr.mxu0 0.0
    %1890 = vmatpush1.msra.mxu0 0.0
    %1891 = vmatprep.subr.mxu0 0.0
    %1892 = vmatpush1.msra.mxu0 0.0
    %1893 = vmatprep.mubr.f32.mxu0 0.0
    %1894 = vmatmul.mubr.f32.gmra.mrb[0].mxu0 %v1827
    %v1895 = vpop.f32.mrb[0].mxu0
    %v1896 = vadd.f32 0.0, %v1895
    %v1897 = vpop.f32.mrb[0].mxu0
    %1898 = vdwg.mxu0
    %v1900 = vrot.slane %v1896, 4
    %v1902 = vadd.f32 %v1191, %v1900
    %v1903 = vxor.u32 %v1902, 2147483648
    %v1904 = vmul.f32 %v1903, 1.442695
    %v1905 = vpow.pop %v1904
    %v1906 = vadd.f32 %v1905, 1.0
    %v1907 = vrcp.pop %v1906
    %v1908 = vmul.f32 1.0, %v1907
    %v1909 = vtanh.pop %v1902
    %v1911 = vrot.slane %v1816, 6
    %v1913 = vmul.f32 %v1908, %v1911
    %1915 = vrot.lane.b32.xlu0 %v1909, 64
    %v1916 = vpop.permute.xlu0 %1915
    %v1918 = vmul.f32 %v1908, %v1916
    %1920 = vrot.lane.b32.xlu0 %v1918, 32
    %v1921 = vpop.permute.xlu0 %1920
    %v1923 = vadd.f32 %v1913, %v1921
    %v1924 = vtanh.pop %v1923
    %1926 = vrot.lane.b32.xlu0 %v1924, 64
    %v1927 = vpop.permute.xlu0 %1926
    %v1929 = vmul.f32 %v1908, %v1927
    %v1931 = vrot.slane %v1929, 4
    %1932 = vrot.lane.b32.xlu0 %v1931, 32
    %v1933 = vpop.permute.xlu0 %1932
    %v1934 = vsel %vm224, %v1933, 0
    %1936 = vmatprep.subr.mxu0 0.0
    %1937 = vmatpush1.msra.mxu0 %v1194
    %1938 = vmatprep.subr.mxu0 0.0
    %1939 = vmatpush1.msra.mxu0 %v1195
    %1940 = vmatprep.subr.mxu0 0.0
    %1941 = vmatpush1.msra.mxu0 %v1196
    %1942 = vmatprep.subr.mxu0 0.0
    %1943 = vmatpush1.msra.mxu0 %v1197
    %1944 = vmatprep.subr.mxu0 0.0
    %1945 = vmatpush1.msra.mxu0 0.0
    %1946 = vmatprep.subr.mxu0 0.0
    %1947 = vmatpush1.msra.mxu0 0.0
    %1948 = vmatprep.subr.mxu0 0.0
    %1949 = vmatpush1.msra.mxu0 0.0
    %1950 = vmatprep.subr.mxu0 0.0
    %1951 = vmatpush1.msra.mxu0 0.0
    %1952 = vmatprep.subr.mxu0 0.0
    %1953 = vmatpush1.msra.mxu0 0.0
    %1954 = vmatprep.subr.mxu0 0.0
    %1955 = vmatpush1.msra.mxu0 0.0
    %1956 = vmatprep.subr.mxu0 0.0
    %1957 = vmatpush1.msra.mxu0 0.0
    %1958 = vmatprep.subr.mxu0 0.0
    %1959 = vmatpush1.msra.mxu0 0.0
    %1960 = vmatprep.subr.mxu0 0.0
    %1961 = vmatpush1.msra.mxu0 0.0
    %1962 = vmatprep.subr.mxu0 0.0
    %1963 = vmatpush1.msra.mxu0 0.0
    %1964 = vmatprep.subr.mxu0 0.0
    %1965 = vmatpush1.msra.mxu0 0.0
    %1966 = vmatprep.subr.mxu0 0.0
    %1967 = vmatpush1.msra.mxu0 0.0
    %1968 = vmatprep.subr.mxu0 0.0
    %1969 = vmatpush1.msra.mxu0 0.0
    %1970 = vmatprep.subr.mxu0 0.0
    %1971 = vmatpush1.msra.mxu0 0.0
    %1972 = vmatprep.subr.mxu0 0.0
    %1973 = vmatpush1.msra.mxu0 0.0
    %1974 = vmatprep.subr.mxu0 0.0
    %1975 = vmatpush1.msra.mxu0 0.0
    %1976 = vmatprep.subr.mxu0 0.0
    %1977 = vmatpush1.msra.mxu0 0.0
    %1978 = vmatprep.subr.mxu0 0.0
    %1979 = vmatpush1.msra.mxu0 0.0
    %1980 = vmatprep.subr.mxu0 0.0
    %1981 = vmatpush1.msra.mxu0 0.0
    %1982 = vmatprep.subr.mxu0 0.0
    %1983 = vmatpush1.msra.mxu0 0.0
    %1984 = vmatprep.subr.mxu0 0.0
    %1985 = vmatpush1.msra.mxu0 0.0
    %1986 = vmatprep.subr.mxu0 0.0
    %1987 = vmatpush1.msra.mxu0 0.0
    %1988 = vmatprep.subr.mxu0 0.0
    %1989 = vmatpush1.msra.mxu0 0.0
    %1990 = vmatprep.subr.mxu0 0.0
    %1991 = vmatpush1.msra.mxu0 0.0
    %1992 = vmatprep.subr.mxu0 0.0
    %1993 = vmatpush1.msra.mxu0 0.0
    %1994 = vmatprep.subr.mxu0 0.0
    %1995 = vmatpush1.msra.mxu0 0.0
    %1996 = vmatprep.subr.mxu0 0.0
    %1997 = vmatpush1.msra.mxu0 0.0
    %1998 = vmatprep.subr.mxu0 0.0
    %1999 = vmatpush1.msra.mxu0 0.0
    %2000 = vmatprep.mubr.f32.mxu0 0.0
    %2001 = vmatmul.mubr.f32.gmra.mrb[0].mxu0 %v1934
    %v2002 = vpop.f32.mrb[0].mxu0
    %v2003 = vadd.f32 0.0, %v2002
    %v2004 = vpop.f32.mrb[0].mxu0
    %2005 = vdwg.mxu0
    %v2007 = vrot.slane %v2003, 2
    %v2009 = vadd.f32 %v1191, %v2007
    %v2010 = vxor.u32 %v2009, 2147483648
    %v2011 = vmul.f32 %v2010, 1.442695
    %v2012 = vpow.pop %v2011
    %v2013 = vadd.f32 %v2012, 1.0
    %v2014 = vrcp.pop %v2013
    %v2015 = vmul.f32 1.0, %v2014
    %v2016 = vtanh.pop %v2009
    %v2018 = vrot.slane %v1923, 6
    %v2020 = vmul.f32 %v2015, %v2018
    %2022 = vrot.lane.b32.xlu0 %v2016, 64
    %v2023 = vpop.permute.xlu0 %2022
    %v2025 = vmul.f32 %v2015, %v2023
    %2027 = vrot.lane.b32.xlu0 %v2025, 32
    %v2028 = vpop.permute.xlu0 %2027
    %v2030 = vadd.f32 %v2020, %v2028
    %v2031 = vtanh.pop %v2030
    %2033 = vrot.lane.b32.xlu0 %v2031, 64
    %v2034 = vpop.permute.xlu0 %2033
    %v2036 = vmul.f32 %v2015, %v2034
    %v2037 = vmax.f32 %v2036, 0.0
    %v2038 = vld [vmem:[%s7] sm:$0xff]
    %v2039 = vld [vmem:[%s7 + $0x8] sm:$0xff]
    %v2040 = vld [vmem:[%s7 + $0x10] sm:$0xff]
    %v2041 = vld [vmem:[%s7 + $0x18] sm:$0xff]
    %v2042 = vld [vmem:[%s8] sm:$0x1]
    %v2044 = vlaneseq
    %v2045 = vshrl.u32 %v2044, 7
    %v2046 = vsub.s32 0, %v2045
    %v2047 = vrot.slane %v2042, %v2046
    %v2050 = vrot.slane %v2037, 6
    %2051 = vrot.lane.b32.xlu0 %v2050, 32
    %v2052 = vpop.permute.xlu0 %2051
    %v2053 = vsel %vm224, %v2052, 0
    %2055 = vmatprep.subr.mxu0 0.0
    %2056 = vmatpush1.msra.mxu0 %v2038
    %2057 = vmatprep.subr.mxu0 0.0
    %2058 = vmatpush1.msra.mxu0 %v2039
    %2059 = vmatprep.subr.mxu0 0.0
    %2060 = vmatpush1.msra.mxu0 %v2040
    %2061 = vmatprep.subr.mxu0 0.0
    %2062 = vmatpush1.msra.mxu0 %v2041
    %2063 = vmatprep.subr.mxu0 0.0
    %2064 = vmatpush1.msra.mxu0 0.0
    %2065 = vmatprep.subr.mxu0 0.0
    %2066 = vmatpush1.msra.mxu0 0.0
    %2067 = vmatprep.subr.mxu0 0.0
    %2068 = vmatpush1.msra.mxu0 0.0
    %2069 = vmatprep.subr.mxu0 0.0
    %2070 = vmatpush1.msra.mxu0 0.0
    %2071 = vmatprep.subr.mxu0 0.0
    %2072 = vmatpush1.msra.mxu0 0.0
    %2073 = vmatprep.subr.mxu0 0.0
    %2074 = vmatpush1.msra.mxu0 0.0
    %2075 = vmatprep.subr.mxu0 0.0
    %2076 = vmatpush1.msra.mxu0 0.0
    %2077 = vmatprep.subr.mxu0 0.0
    %2078 = vmatpush1.msra.mxu0 0.0
    %2079 = vmatprep.subr.mxu0 0.0
    %2080 = vmatpush1.msra.mxu0 0.0
    %2081 = vmatprep.subr.mxu0 0.0
    %2082 = vmatpush1.msra.mxu0 0.0
    %2083 = vmatprep.subr.mxu0 0.0
    %2084 = vmatpush1.msra.mxu0 0.0
    %2085 = vmatprep.subr.mxu0 0.0
    %2086 = vmatpush1.msra.mxu0 0.0
    %2087 = vmatprep.subr.mxu0 0.0
    %2088 = vmatpush1.msra.mxu0 0.0
    %2089 = vmatprep.subr.mxu0 0.0
    %2090 = vmatpush1.msra.mxu0 0.0
    %2091 = vmatprep.subr.mxu0 0.0
    %2092 = vmatpush1.msra.mxu0 0.0
    %2093 = vmatprep.subr.mxu0 0.0
    %2094 = vmatpush1.msra.mxu0 0.0
    %2095 = vmatprep.subr.mxu0 0.0
    %2096 = vmatpush1.msra.mxu0 0.0
    %2097 = vmatprep.subr.mxu0 0.0
    %2098 = vmatpush1.msra.mxu0 0.0
    %2099 = vmatprep.subr.mxu0 0.0
    %2100 = vmatpush1.msra.mxu0 0.0
    %2101 = vmatprep.subr.mxu0 0.0
    %2102 = vmatpush1.msra.mxu0 0.0
    %2103 = vmatprep.subr.mxu0 0.0
    %2104 = vmatpush1.msra.mxu0 0.0
    %2105 = vmatprep.subr.mxu0 0.0
    %2106 = vmatpush1.msra.mxu0 0.0
    %2107 = vmatprep.subr.mxu0 0.0
    %2108 = vmatpush1.msra.mxu0 0.0
    %2109 = vmatprep.subr.mxu0 0.0
    %2110 = vmatpush1.msra.mxu0 0.0
    %2111 = vmatprep.subr.mxu0 0.0
    %2112 = vmatpush1.msra.mxu0 0.0
    %2113 = vmatprep.subr.mxu0 0.0
    %2114 = vmatpush1.msra.mxu0 0.0
    %2115 = vmatprep.subr.mxu0 0.0
    %2116 = vmatpush1.msra.mxu0 0.0
    %2117 = vmatprep.subr.mxu0 0.0
    %2118 = vmatpush1.msra.mxu0 0.0
    %2119 = vmatprep.mubr.f32.mxu0 0.0
    %2120 = vmatmul.mubr.f32.gmra.mrb[0].mxu0 %v2053
    %v2121 = vpop.f32.mrb[0].mxu0
    %v2122 = vadd.f32 %v2047, %v2121
    %v2123 = vpop.f32.mrb[0].mxu0
    %2124 = vdwg.mxu0
    %vm2125 = vcmask 74752
    %2126 = vst.msk [vmem:[#allocation9] sm:$0x3] %vm2125, %v2122
    // Predicated region
    $region46: #{rnn_forward.1} parent=1 // pred_check
      _
    $region47: #{rnn_forward.1} parent=1 // pred_check_branch
      %2128 = sbr.rel (0) target = $region49
    $region48: #{rnn_forward.1} parent=1 // pred_region
      %s2130 = ssub.s32 32, 32
      %2131 = vsyncadd [#allocation6], %s2130
      %s2133 = sshll.u32 [#allocation9], 4
      %s2134 = int_to_ptr.vmem [resolvable:$true] %s2133
      %2136 = dma.vmem_to_hbm [thread:$0]  %s2134, 32, %s9, [#allocation6]
    $region49: #{rnn_forward.1} parent=1 // pred_fallthru
      _
    // Predicated region
    $region50: #{rnn_forward.1} parent=1 // pred_check
      _
    $region51: #{rnn_forward.1} parent=1 // pred_check_branch
      %2138 = sbr.rel (0) target = $region53
    $region52: #{rnn_forward.1} parent=1 // pred_region
      %2139 = dma.done [#allocation6], 32
    $region53: #{rnn_forward.1} parent=1 // pred_fallthru
      _
    %2140 = vsyncpa [#allocation5], 1
    %2141 = vsyncpa [#allocation8], 1
    %2142 = vsyncpa [#allocation6], 1

</llo_original>
